<compile_context>
chip_gen: v7x
topology: tpu7x:2x2x1
jax: 0.10.0
libtpu: 0.0.40
codegen_flags: <defaults>
</compile_context>

<pallas_src>
import functools

import jax
import jax.numpy as jnp
from jax.experimental import pallas as pl
from jax.experimental.pallas import tpu as pltpu


BP = 8  # padded batch = one full sublane tile


# ----------------------------------------------------------------------------
# Kernel
# ----------------------------------------------------------------------------
def vae_kernel(x_ref,        # (T*Bp, XR)  rows: [x[t,b] | x[T-1-t,b] | 1 | 0-pad]
               w_slab_ref,   # (XR + 2H, 8H)  [w_in_aug ; w_hh] (gate cols pre-scaled)
               head_ref,     # (2H + 3*Bp + H, H)  [w_rh ; b_rh ; w2 ; b2 ; eps]
               z_ref,        # out: (Bp, Z)
               *, T, Bp, H, Z):
    H2 = 2 * H
    XR = x_ref.shape[1]

    # One big matmul: every timestep's (fwd + bwd) input projection with the
    # (b_ih + b_hh) biases folded in via the ones column / bias row.
    gin = jnp.dot(x_ref[...], w_slab_ref[:XR, :],
                  preferred_element_type=jnp.float32)            # (T*Bp, 8H)

    w_hh = w_slab_ref[XR:, :]                                    # (2H, 8H) block-diag

    h = jnp.zeros((Bp, H2), jnp.float32)                         # [h_fwd | h_bwd]
    c = jnp.zeros((Bp, H2), jnp.float32)                         # [c_fwd | c_bwd]

    # Fully-unrolled fused fwd+bwd recurrence (T small & static). Gate lanes,
    # gate-major: [i(2H), f(2H), g(2H), o(2H)], each block = [fwd | bwd].
    # Packing pre-scaled i/f/o pre-activations by 0.5 (g left unscaled), so one
    # tanh over the full gates gives sigmoid for i/f/o and tanh for g.
    for t in range(T):
        gates = (jnp.dot(h, w_hh, preferred_element_type=jnp.float32)
                 + gin[t * Bp:(t + 1) * Bp, :])                  # sublane-aligned slice
        a = jnp.tanh(gates)                                      # 2 EUP pushes / step
        i_g = 0.5 * a[:, 0:H2] + 0.5
        f_g = 0.5 * a[:, H2:2 * H2] + 0.5
        g_g = a[:, 2 * H2:3 * H2]
        o_g = 0.5 * a[:, 3 * H2:4 * H2] + 0.5
        c = f_g * c + i_g * g_g
        h = o_g * jnp.tanh(c)                                    # 1 EUP push / step

    # Head: reduce_h_W -> softplus -> [fc21 | fc22] -> reparameterized sample.
    r = 0
    w_rh = head_ref[r:r + H2, :]; r += H2        # (2H, H)
    b_rh = head_ref[r:r + Bp, :]; r += Bp        # (Bp, H)  rows pre-broadcast
    w2 = head_ref[r:r + H, :];    r += H         # (H, H)   cols 0:2Z valid
    b2 = head_ref[r:r + Bp, :];   r += Bp        # (Bp, H)
    eps = head_ref[r:r + Bp, :]                  # (Bp, H)  cols 0:Z valid

    hidden = jax.nn.softplus(
        jnp.dot(h, w_rh, preferred_element_type=jnp.float32) + b_rh)
    z2 = jnp.dot(hidden, w2, preferred_element_type=jnp.float32) + b2
    z_loc = z2[:, :Z]
    z_scale = jnp.exp(z2[:, Z:2 * Z])
    # TODO(synk): (Bp, Z)=(8,8) is a masked store; only pad to 128 lanes if it
    #             ever shows in the bundle (review: low priority).
    z_ref[...] = (z_loc + z_scale * eps[:, :Z]).astype(z_ref.dtype)


# ----------------------------------------------------------------------------
# Wrapper-side packing (plain JAX): 11 logical operands -> 3 slabs / 3 DMAs
# ----------------------------------------------------------------------------
def pack_inputs(x, p, eps, Bp):
    """Weight convention (from real PyTorch weights this is weight_ih_l0.T /
    weight_hh_l0.T with gate order (i,f,g,o) and bias = bias_ih + bias_hh):
        wih_{f,b}: (I,4H)  whh_{f,b}: (H,4H)  b_{f,b}: (1,4H)
    Gate columns in the packed slabs are gate-major / direction-minor:
        [i_f,i_b,f_f,f_b,g_f,g_b,o_f,o_b], each width H (total 8H).
    """
    B, T, I = x.shape
    H = p["whh_f"].shape[0]
    Z = p["w21"].shape[1]
    assert B <= Bp and 2 * Z <= H and H % 8 == 0

    def interleave_cols(wf, wb):
        rows = wf.shape[0]
        return jnp.stack([wf.reshape(rows, 4, H), wb.reshape(rows, 4, H)],
                         axis=2).reshape(rows, 8 * H)

    zI = jnp.zeros_like(p["wih_f"])
    zH = jnp.zeros_like(p["whh_f"])

    # Rows [0:I] see x[t] -> forward gate columns; rows [I:2I] see x[T-1-t]
    # -> backward gate columns. Recurrence weights are block-diagonal.
    w_in = jnp.concatenate([interleave_cols(p["wih_f"], zI),
                            interleave_cols(zI, p["wih_b"])], axis=0)   # (2I, 8H)
    b_in = interleave_cols(p["b_f"], p["b_b"])                          # (1, 8H)
    w_hh = jnp.concatenate([interleave_cols(p["whh_f"], zH),
                            interleave_cols(zH, p["whh_b"])], axis=0)   # (2H, 8H)

    # Slab 1: x, time-major, fwd+reversed side by side, ones column (bias),
    # batch zero-padded to Bp, columns padded to a multiple of 8.
    XR = ((2 * I + 1 + 7) // 8) * 8
    x_tm = jnp.transpose(x, (1, 0, 2)).astype(jnp.float32)              # (T, B, I)
    x_tm = jnp.pad(x_tm, ((0, 0), (0, Bp - B), (0, 0)))                 # (T, Bp, I)
    x_slab = jnp.concatenate(
        [x_tm, x_tm[::-1],
         jnp.ones((T, Bp, 1), jnp.float32),
         jnp.zeros((T, Bp, XR - 2 * I - 1), jnp.float32)],
        axis=-1).reshape(T * Bp, XR)

    # Slab 2: [w_in rows ; bias row ; zero-pad to XR ; w_hh], width 8H.
    w_top = jnp.zeros((XR, 8 * H), jnp.float32)
    w_top = w_top.at[:2 * I, :].set(w_in)
    w_top = w_top.at[2 * I, :].set(b_in[0])
    w_slab = jnp.concatenate([w_top, w_hh], axis=0)                     # (XR+2H, 8H)
    # Pre-scale i/f/o gate pre-activations by 0.5 (g stays at 1) so the kernel
    # uses one tanh: sigmoid(x) = 0.5*tanh(0.5*x) + 0.5, tanh(g) directly.
    col_scale = jnp.full((8 * H,), 0.5, jnp.float32).at[4 * H:6 * H].set(1.0)
    w_slab = w_slab * col_scale[None, :]

    # Slab 3: head weights + eps, width H, every row segment sublane-aligned;
    # biases pre-broadcast to Bp rows so the kernel adds them with no reshape.
    def padc(a):
        return jnp.pad(a.astype(jnp.float32), ((0, 0), (0, H - a.shape[1])))

    w2 = jnp.concatenate([p["w21"], p["w22"]], axis=1)                  # (H, 2Z)
    b2 = jnp.concatenate([p["b21"], p["b22"]], axis=1)                  # (1, 2Z)
    eps_p = jnp.pad(eps.astype(jnp.float32), ((0, Bp - B), (0, 0)))     # (Bp, Z)
    head = jnp.concatenate([
        p["w_rh"].astype(jnp.float32),                                  # (2H, H)
        jnp.broadcast_to(p["b_rh"].astype(jnp.float32), (Bp, H)),       # (Bp, H)
        padc(w2),                                                       # (H, H)
        jnp.broadcast_to(padc(b2), (Bp, H)),                            # (Bp, H)
        padc(eps_p),                                                    # (Bp, H)
    ], axis=0)

    return x_slab, w_slab, head


# ----------------------------------------------------------------------------
# Wrapper
# ----------------------------------------------------------------------------
def vae_forward(x, params, eps):
    """x: (B, T, input_size) batch_first, eps: (B, z_dim) ~ N(0,1)."""
    B, T, _ = x.shape
    H = params["whh_f"].shape[0]
    Z = params["w21"].shape[1]
    Bp = BP

    x_slab, w_slab, head = pack_inputs(x, params, eps, Bp)

    kernel = functools.partial(vae_kernel, T=T, Bp=Bp, H=H, Z=Z)
    # Working set ~90 KB f32 -> gridless, whole arrays in VMEM on v5e/v6e/v7x.
    z_pad = pl.pallas_call(
        kernel,
        out_shape=jax.ShapeDtypeStruct((Bp, Z), jnp.float32),
        in_specs=[pl.BlockSpec(memory_space=pltpu.MemorySpace.VMEM)] * 3,
        out_specs=pl.BlockSpec(memory_space=pltpu.MemorySpace.VMEM),
    )(x_slab, w_slab, head)
    return z_pad[:B]


# ----------------------------------------------------------------------------
# Deterministic synthetic weights (shapes match the nn.Module)
# ----------------------------------------------------------------------------
def make_params(key, input_size, z_dim, hidden_size):
    ks = jax.random.split(key, 12)
    H, I, Z = hidden_size, input_size, z_dim
    s = 0.1

    def w(k, shape):
        return (s * jax.random.normal(k, shape)).astype(jnp.float32)

    # LSTM layer-0 weights, pre-transposed; biases pre-summed (b_ih + b_hh).
    return dict(
        wih_f=w(ks[0], (I, 4 * H)), whh_f=w(ks[1], (H, 4 * H)),
        b_f=w(ks[2], (1, 4 * H)),
        wih_b=w(ks[3], (I, 4 * H)), whh_b=w(ks[4], (H, 4 * H)),
        b_b=w(ks[5], (1, 4 * H)),
        w_rh=w(ks[6], (2 * H, H)), b_rh=w(ks[7], (1, H)),
        w21=w(ks[8], (H, Z)), b21=w(ks[9], (1, Z)),
        w22=w(ks[10], (H, Z)), b22=w(ks[11], (1, Z)),
    )


# ----------------------------------------------------------------------------
# Pure-JAX reference (faithful per-direction math, for correctness check)
# ----------------------------------------------------------------------------
def ref_forward(x, p, eps):
    B, T, _ = x.shape
    H = p["whh_f"].shape[0]

    def cell(x_t, h, c, wih, whh, b):
        g = x_t @ wih + h @ whh + b
        i = jax.nn.sigmoid(g[:, :H])
        f = jax.nn.sigmoid(g[:, H:2 * H])
        gg = jnp.tanh(g[:, 2 * H:3 * H])
        o = jax.nn.sigmoid(g[:, 3 * H:])
        c = f * c + i * gg
        return o * jnp.tanh(c), c

    h_f = c_f = h_b = c_b = jnp.zeros((B, H), jnp.float32)
    for t in range(T):
        h_f, c_f = cell(x[:, t], h_f, c_f, p["wih_f"], p["whh_f"], p["b_f"])
    for t in reversed(range(T)):
        h_b, c_b = cell(x[:, t], h_b, c_b, p["wih_b"], p["whh_b"], p["b_b"])

    new_h = jnp.concatenate([h_f, h_b], axis=1) @ p["w_rh"] + p["b_rh"]
    hidden = jax.nn.softplus(new_h)
    z_loc = hidden @ p["w21"] + p["b21"]
    z_scale = jnp.exp(hidden @ p["w22"] + p["b22"])
    return z_loc + z_scale * eps


if __name__ == "__main__":
    B, T, INPUT, HIDDEN, ZDIM = 2, 8, 4, 32, 8

    key = jax.random.PRNGKey(0)
    kx, kp, ke = jax.random.split(key, 3)

    x = jax.random.normal(kx, (B, T, INPUT), dtype=jnp.float32)
    params = make_params(kp, INPUT, ZDIM, HIDDEN)
    eps = jax.random.normal(ke, (B, ZDIM), dtype=jnp.float32)

    z = jax.block_until_ready(vae_forward(x, params, eps))
    z_ref = ref_forward(x, params, eps)

    assert z.shape == (B, ZDIM)
    assert jnp.allclose(z, z_ref, rtol=2e-4, atol=2e-5), (z, z_ref)
    print("KERNEL_OK")
</pallas_src>

<mosaic_0001>
module attributes {stable_mosaic.version = 11 : i64} {
  func.func @vae_kernel(%arg0: memref<64x16xf32, #tpu.memory_space<vmem>>, %arg1: memref<80x256xf32, #tpu.memory_space<vmem>>, %arg2: memref<120x32xf32, #tpu.memory_space<vmem>>, %arg3: memref<8x8xf32, #tpu.memory_space<vmem>>) attributes {dimension_semantics = [], scalar_prefetch = 0 : i64, scratch_operands = 0 : i64, tpu.core_type = #tpu.core_type<tc>} {
    %c0 = arith.constant 0 : index
    %c0_0 = arith.constant 0 : index
    %0 = vector.load %arg0[%c0, %c0_0] : memref<64x16xf32, #tpu.memory_space<vmem>>, vector<64x16xf32>
    %c0_1 = arith.constant 0 : index
    %c0_2 = arith.constant 0 : index
    %1 = vector.load %arg1[%c0_1, %c0_2] : memref<80x256xf32, #tpu.memory_space<vmem>>, vector<16x256xf32>
    %cst = arith.constant dense<0.000000e+00> : vector<64x256xf32>
    %2 = tpu.matmul %0, %1, %cst {dimension_numbers = #tpu.dot_dimension_numbers<[1], [0], [0], [1], [0, 0, 1, 1], [], []>} : vector<64x16xf32>, vector<16x256xf32>, vector<64x256xf32> -> vector<64x256xf32>
    %c16 = arith.constant 16 : index
    %c0_3 = arith.constant 0 : index
    %3 = vector.load %arg1[%c16, %c0_3] : memref<80x256xf32, #tpu.memory_space<vmem>>, vector<64x256xf32>
    %cst_4 = arith.constant 0.000000e+00 : f32
    %4 = vector.broadcast %cst_4 : f32 to vector<8x64xf32>
    %cst_5 = arith.constant 0.000000e+00 : f32
    %5 = vector.broadcast %cst_5 : f32 to vector<8x64xf32>
    %cst_6 = arith.constant dense<0.000000e+00> : vector<8x256xf32>
    %6 = tpu.matmul %4, %3, %cst_6 {dimension_numbers = #tpu.dot_dimension_numbers<[1], [0], [0], [1], [0, 0, 1, 1], [], []>} : vector<8x64xf32>, vector<64x256xf32>, vector<8x256xf32> -> vector<8x256xf32>
    %7 = vector.extract_strided_slice %2 {offsets = [0, 0], sizes = [8, 256], strides = [1, 1]} : vector<64x256xf32> to vector<8x256xf32>
    %8 = arith.addf %6, %7 : vector<8x256xf32>
    %9 = math.tanh %8 : vector<8x256xf32>
    %10 = vector.extract_strided_slice %9 {offsets = [0, 0], sizes = [8, 64], strides = [1, 1]} : vector<8x256xf32> to vector<8x64xf32>
    %cst_7 = arith.constant 5.000000e-01 : f32
    %11 = vector.broadcast %cst_7 : f32 to vector<8x64xf32>
    %12 = arith.mulf %11, %10 : vector<8x64xf32>
    %cst_8 = arith.constant 5.000000e-01 : f32
    %13 = vector.broadcast %cst_8 : f32 to vector<8x64xf32>
    %14 = arith.addf %12, %13 : vector<8x64xf32>
    %15 = vector.extract_strided_slice %9 {offsets = [0, 64], sizes = [8, 64], strides = [1, 1]} : vector<8x256xf32> to vector<8x64xf32>
    %cst_9 = arith.constant 5.000000e-01 : f32
    %16 = vector.broadcast %cst_9 : f32 to vector<8x64xf32>
    %17 = arith.mulf %16, %15 : vector<8x64xf32>
    %cst_10 = arith.constant 5.000000e-01 : f32
    %18 = vector.broadcast %cst_10 : f32 to vector<8x64xf32>
    %19 = arith.addf %17, %18 : vector<8x64xf32>
    %20 = vector.extract_strided_slice %9 {offsets = [0, 128], sizes = [8, 64], strides = [1, 1]} : vector<8x256xf32> to vector<8x64xf32>
    %21 = vector.extract_strided_slice %9 {offsets = [0, 192], sizes = [8, 64], strides = [1, 1]} : vector<8x256xf32> to vector<8x64xf32>
    %cst_11 = arith.constant 5.000000e-01 : f32
    %22 = vector.broadcast %cst_11 : f32 to vector<8x64xf32>
    %23 = arith.mulf %22, %21 : vector<8x64xf32>
    %cst_12 = arith.constant 5.000000e-01 : f32
    %24 = vector.broadcast %cst_12 : f32 to vector<8x64xf32>
    %25 = arith.addf %23, %24 : vector<8x64xf32>
    %26 = arith.mulf %19, %5 : vector<8x64xf32>
    %27 = arith.mulf %14, %20 : vector<8x64xf32>
    %28 = arith.addf %26, %27 : vector<8x64xf32>
    %29 = math.tanh %28 : vector<8x64xf32>
    %30 = arith.mulf %25, %29 : vector<8x64xf32>
    %cst_13 = arith.constant dense<0.000000e+00> : vector<8x256xf32>
    %31 = tpu.matmul %30, %3, %cst_13 {dimension_numbers = #tpu.dot_dimension_numbers<[1], [0], [0], [1], [0, 0, 1, 1], [], []>} : vector<8x64xf32>, vector<64x256xf32>, vector<8x256xf32> -> vector<8x256xf32>
    %32 = vector.extract_strided_slice %2 {offsets = [8, 0], sizes = [8, 256], strides = [1, 1]} : vector<64x256xf32> to vector<8x256xf32>
    %33 = arith.addf %31, %32 : vector<8x256xf32>
    %34 = math.tanh %33 : vector<8x256xf32>
    %35 = vector.extract_strided_slice %34 {offsets = [0, 0], sizes = [8, 64], strides = [1, 1]} : vector<8x256xf32> to vector<8x64xf32>
    %cst_14 = arith.constant 5.000000e-01 : f32
    %36 = vector.broadcast %cst_14 : f32 to vector<8x64xf32>
    %37 = arith.mulf %36, %35 : vector<8x64xf32>
    %cst_15 = arith.constant 5.000000e-01 : f32
    %38 = vector.broadcast %cst_15 : f32 to vector<8x64xf32>
    %39 = arith.addf %37, %38 : vector<8x64xf32>
    %40 = vector.extract_strided_slice %34 {offsets = [0, 64], sizes = [8, 64], strides = [1, 1]} : vector<8x256xf32> to vector<8x64xf32>
    %cst_16 = arith.constant 5.000000e-01 : f32
    %41 = vector.broadcast %cst_16 : f32 to vector<8x64xf32>
    %42 = arith.mulf %41, %40 : vector<8x64xf32>
    %cst_17 = arith.constant 5.000000e-01 : f32
    %43 = vector.broadcast %cst_17 : f32 to vector<8x64xf32>
    %44 = arith.addf %42, %43 : vector<8x64xf32>
    %45 = vector.extract_strided_slice %34 {offsets = [0, 128], sizes = [8, 64], strides = [1, 1]} : vector<8x256xf32> to vector<8x64xf32>
    %46 = vector.extract_strided_slice %34 {offsets = [0, 192], sizes = [8, 64], strides = [1, 1]} : vector<8x256xf32> to vector<8x64xf32>
    %cst_18 = arith.constant 5.000000e-01 : f32
    %47 = vector.broadcast %cst_18 : f32 to vector<8x64xf32>
    %48 = arith.mulf %47, %46 : vector<8x64xf32>
    %cst_19 = arith.constant 5.000000e-01 : f32
    %49 = vector.broadcast %cst_19 : f32 to vector<8x64xf32>
    %50 = arith.addf %48, %49 : vector<8x64xf32>
    %51 = arith.mulf %44, %28 : vector<8x64xf32>
    %52 = arith.mulf %39, %45 : vector<8x64xf32>
    %53 = arith.addf %51, %52 : vector<8x64xf32>
    %54 = math.tanh %53 : vector<8x64xf32>
    %55 = arith.mulf %50, %54 : vector<8x64xf32>
    %cst_20 = arith.constant dense<0.000000e+00> : vector<8x256xf32>
    %56 = tpu.matmul %55, %3, %cst_20 {dimension_numbers = #tpu.dot_dimension_numbers<[1], [0], [0], [1], [0, 0, 1, 1], [], []>} : vector<8x64xf32>, vector<64x256xf32>, vector<8x256xf32> -> vector<8x256xf32>
    %57 = vector.extract_strided_slice %2 {offsets = [16, 0], sizes = [8, 256], strides = [1, 1]} : vector<64x256xf32> to vector<8x256xf32>
    %58 = arith.addf %56, %57 : vector<8x256xf32>
    %59 = math.tanh %58 : vector<8x256xf32>
    %60 = vector.extract_strided_slice %59 {offsets = [0, 0], sizes = [8, 64], strides = [1, 1]} : vector<8x256xf32> to vector<8x64xf32>
    %cst_21 = arith.constant 5.000000e-01 : f32
    %61 = vector.broadcast %cst_21 : f32 to vector<8x64xf32>
    %62 = arith.mulf %61, %60 : vector<8x64xf32>
    %cst_22 = arith.constant 5.000000e-01 : f32
    %63 = vector.broadcast %cst_22 : f32 to vector<8x64xf32>
    %64 = arith.addf %62, %63 : vector<8x64xf32>
    %65 = vector.extract_strided_slice %59 {offsets = [0, 64], sizes = [8, 64], strides = [1, 1]} : vector<8x256xf32> to vector<8x64xf32>
    %cst_23 = arith.constant 5.000000e-01 : f32
    %66 = vector.broadcast %cst_23 : f32 to vector<8x64xf32>
    %67 = arith.mulf %66, %65 : vector<8x64xf32>
    %cst_24 = arith.constant 5.000000e-01 : f32
    %68 = vector.broadcast %cst_24 : f32 to vector<8x64xf32>
    %69 = arith.addf %67, %68 : vector<8x64xf32>
    %70 = vector.extract_strided_slice %59 {offsets = [0, 128], sizes = [8, 64], strides = [1, 1]} : vector<8x256xf32> to vector<8x64xf32>
    %71 = vector.extract_strided_slice %59 {offsets = [0, 192], sizes = [8, 64], strides = [1, 1]} : vector<8x256xf32> to vector<8x64xf32>
    %cst_25 = arith.constant 5.000000e-01 : f32
    %72 = vector.broadcast %cst_25 : f32 to vector<8x64xf32>
    %73 = arith.mulf %72, %71 : vector<8x64xf32>
    %cst_26 = arith.constant 5.000000e-01 : f32
    %74 = vector.broadcast %cst_26 : f32 to vector<8x64xf32>
    %75 = arith.addf %73, %74 : vector<8x64xf32>
    %76 = arith.mulf %69, %53 : vector<8x64xf32>
    %77 = arith.mulf %64, %70 : vector<8x64xf32>
    %78 = arith.addf %76, %77 : vector<8x64xf32>
    %79 = math.tanh %78 : vector<8x64xf32>
    %80 = arith.mulf %75, %79 : vector<8x64xf32>
    %cst_27 = arith.constant dense<0.000000e+00> : vector<8x256xf32>
    %81 = tpu.matmul %80, %3, %cst_27 {dimension_numbers = #tpu.dot_dimension_numbers<[1], [0], [0], [1], [0, 0, 1, 1], [], []>} : vector<8x64xf32>, vector<64x256xf32>, vector<8x256xf32> -> vector<8x256xf32>
    %82 = vector.extract_strided_slice %2 {offsets = [24, 0], sizes = [8, 256], strides = [1, 1]} : vector<64x256xf32> to vector<8x256xf32>
    %83 = arith.addf %81, %82 : vector<8x256xf32>
    %84 = math.tanh %83 : vector<8x256xf32>
    %85 = vector.extract_strided_slice %84 {offsets = [0, 0], sizes = [8, 64], strides = [1, 1]} : vector<8x256xf32> to vector<8x64xf32>
    %cst_28 = arith.constant 5.000000e-01 : f32
    %86 = vector.broadcast %cst_28 : f32 to vector<8x64xf32>
    %87 = arith.mulf %86, %85 : vector<8x64xf32>
    %cst_29 = arith.constant 5.000000e-01 : f32
    %88 = vector.broadcast %cst_29 : f32 to vector<8x64xf32>
    %89 = arith.addf %87, %88 : vector<8x64xf32>
    %90 = vector.extract_strided_slice %84 {offsets = [0, 64], sizes = [8, 64], strides = [1, 1]} : vector<8x256xf32> to vector<8x64xf32>
    %cst_30 = arith.constant 5.000000e-01 : f32
    %91 = vector.broadcast %cst_30 : f32 to vector<8x64xf32>
    %92 = arith.mulf %91, %90 : vector<8x64xf32>
    %cst_31 = arith.constant 5.000000e-01 : f32
    %93 = vector.broadcast %cst_31 : f32 to vector<8x64xf32>
    %94 = arith.addf %92, %93 : vector<8x64xf32>
    %95 = vector.extract_strided_slice %84 {offsets = [0, 128], sizes = [8, 64], strides = [1, 1]} : vector<8x256xf32> to vector<8x64xf32>
    %96 = vector.extract_strided_slice %84 {offsets = [0, 192], sizes = [8, 64], strides = [1, 1]} : vector<8x256xf32> to vector<8x64xf32>
    %cst_32 = arith.constant 5.000000e-01 : f32
    %97 = vector.broadcast %cst_32 : f32 to vector<8x64xf32>
    %98 = arith.mulf %97, %96 : vector<8x64xf32>
    %cst_33 = arith.constant 5.000000e-01 : f32
    %99 = vector.broadcast %cst_33 : f32 to vector<8x64xf32>
    %100 = arith.addf %98, %99 : vector<8x64xf32>
    %101 = arith.mulf %94, %78 : vector<8x64xf32>
    %102 = arith.mulf %89, %95 : vector<8x64xf32>
    %103 = arith.addf %101, %102 : vector<8x64xf32>
    %104 = math.tanh %103 : vector<8x64xf32>
    %105 = arith.mulf %100, %104 : vector<8x64xf32>
    %cst_34 = arith.constant dense<0.000000e+00> : vector<8x256xf32>
    %106 = tpu.matmul %105, %3, %cst_34 {dimension_numbers = #tpu.dot_dimension_numbers<[1], [0], [0], [1], [0, 0, 1, 1], [], []>} : vector<8x64xf32>, vector<64x256xf32>, vector<8x256xf32> -> vector<8x256xf32>
    %107 = vector.extract_strided_slice %2 {offsets = [32, 0], sizes = [8, 256], strides = [1, 1]} : vector<64x256xf32> to vector<8x256xf32>
    %108 = arith.addf %106, %107 : vector<8x256xf32>
    %109 = math.tanh %108 : vector<8x256xf32>
    %110 = vector.extract_strided_slice %109 {offsets = [0, 0], sizes = [8, 64], strides = [1, 1]} : vector<8x256xf32> to vector<8x64xf32>
    %cst_35 = arith.constant 5.000000e-01 : f32
    %111 = vector.broadcast %cst_35 : f32 to vector<8x64xf32>
    %112 = arith.mulf %111, %110 : vector<8x64xf32>
    %cst_36 = arith.constant 5.000000e-01 : f32
    %113 = vector.broadcast %cst_36 : f32 to vector<8x64xf32>
    %114 = arith.addf %112, %113 : vector<8x64xf32>
    %115 = vector.extract_strided_slice %109 {offsets = [0, 64], sizes = [8, 64], strides = [1, 1]} : vector<8x256xf32> to vector<8x64xf32>
    %cst_37 = arith.constant 5.000000e-01 : f32
    %116 = vector.broadcast %cst_37 : f32 to vector<8x64xf32>
    %117 = arith.mulf %116, %115 : vector<8x64xf32>
    %cst_38 = arith.constant 5.000000e-01 : f32
    %118 = vector.broadcast %cst_38 : f32 to vector<8x64xf32>
    %119 = arith.addf %117, %118 : vector<8x64xf32>
    %120 = vector.extract_strided_slice %109 {offsets = [0, 128], sizes = [8, 64], strides = [1, 1]} : vector<8x256xf32> to vector<8x64xf32>
    %121 = vector.extract_strided_slice %109 {offsets = [0, 192], sizes = [8, 64], strides = [1, 1]} : vector<8x256xf32> to vector<8x64xf32>
    %cst_39 = arith.constant 5.000000e-01 : f32
    %122 = vector.broadcast %cst_39 : f32 to vector<8x64xf32>
    %123 = arith.mulf %122, %121 : vector<8x64xf32>
    %cst_40 = arith.constant 5.000000e-01 : f32
    %124 = vector.broadcast %cst_40 : f32 to vector<8x64xf32>
    %125 = arith.addf %123, %124 : vector<8x64xf32>
    %126 = arith.mulf %119, %103 : vector<8x64xf32>
    %127 = arith.mulf %114, %120 : vector<8x64xf32>
    %128 = arith.addf %126, %127 : vector<8x64xf32>
    %129 = math.tanh %128 : vector<8x64xf32>
    %130 = arith.mulf %125, %129 : vector<8x64xf32>
    %cst_41 = arith.constant dense<0.000000e+00> : vector<8x256xf32>
    %131 = tpu.matmul %130, %3, %cst_41 {dimension_numbers = #tpu.dot_dimension_numbers<[1], [0], [0], [1], [0, 0, 1, 1], [], []>} : vector<8x64xf32>, vector<64x256xf32>, vector<8x256xf32> -> vector<8x256xf32>
    %132 = vector.extract_strided_slice %2 {offsets = [40, 0], sizes = [8, 256], strides = [1, 1]} : vector<64x256xf32> to vector<8x256xf32>
    %133 = arith.addf %131, %132 : vector<8x256xf32>
    %134 = math.tanh %133 : vector<8x256xf32>
    %135 = vector.extract_strided_slice %134 {offsets = [0, 0], sizes = [8, 64], strides = [1, 1]} : vector<8x256xf32> to vector<8x64xf32>
    %cst_42 = arith.constant 5.000000e-01 : f32
    %136 = vector.broadcast %cst_42 : f32 to vector<8x64xf32>
    %137 = arith.mulf %136, %135 : vector<8x64xf32>
    %cst_43 = arith.constant 5.000000e-01 : f32
    %138 = vector.broadcast %cst_43 : f32 to vector<8x64xf32>
    %139 = arith.addf %137, %138 : vector<8x64xf32>
    %140 = vector.extract_strided_slice %134 {offsets = [0, 64], sizes = [8, 64], strides = [1, 1]} : vector<8x256xf32> to vector<8x64xf32>
    %cst_44 = arith.constant 5.000000e-01 : f32
    %141 = vector.broadcast %cst_44 : f32 to vector<8x64xf32>
    %142 = arith.mulf %141, %140 : vector<8x64xf32>
    %cst_45 = arith.constant 5.000000e-01 : f32
    %143 = vector.broadcast %cst_45 : f32 to vector<8x64xf32>
    %144 = arith.addf %142, %143 : vector<8x64xf32>
    %145 = vector.extract_strided_slice %134 {offsets = [0, 128], sizes = [8, 64], strides = [1, 1]} : vector<8x256xf32> to vector<8x64xf32>
    %146 = vector.extract_strided_slice %134 {offsets = [0, 192], sizes = [8, 64], strides = [1, 1]} : vector<8x256xf32> to vector<8x64xf32>
    %cst_46 = arith.constant 5.000000e-01 : f32
    %147 = vector.broadcast %cst_46 : f32 to vector<8x64xf32>
    %148 = arith.mulf %147, %146 : vector<8x64xf32>
    %cst_47 = arith.constant 5.000000e-01 : f32
    %149 = vector.broadcast %cst_47 : f32 to vector<8x64xf32>
    %150 = arith.addf %148, %149 : vector<8x64xf32>
    %151 = arith.mulf %144, %128 : vector<8x64xf32>
    %152 = arith.mulf %139, %145 : vector<8x64xf32>
    %153 = arith.addf %151, %152 : vector<8x64xf32>
    %154 = math.tanh %153 : vector<8x64xf32>
    %155 = arith.mulf %150, %154 : vector<8x64xf32>
    %cst_48 = arith.constant dense<0.000000e+00> : vector<8x256xf32>
    %156 = tpu.matmul %155, %3, %cst_48 {dimension_numbers = #tpu.dot_dimension_numbers<[1], [0], [0], [1], [0, 0, 1, 1], [], []>} : vector<8x64xf32>, vector<64x256xf32>, vector<8x256xf32> -> vector<8x256xf32>
    %157 = vector.extract_strided_slice %2 {offsets = [48, 0], sizes = [8, 256], strides = [1, 1]} : vector<64x256xf32> to vector<8x256xf32>
    %158 = arith.addf %156, %157 : vector<8x256xf32>
    %159 = math.tanh %158 : vector<8x256xf32>
    %160 = vector.extract_strided_slice %159 {offsets = [0, 0], sizes = [8, 64], strides = [1, 1]} : vector<8x256xf32> to vector<8x64xf32>
    %cst_49 = arith.constant 5.000000e-01 : f32
    %161 = vector.broadcast %cst_49 : f32 to vector<8x64xf32>
    %162 = arith.mulf %161, %160 : vector<8x64xf32>
    %cst_50 = arith.constant 5.000000e-01 : f32
    %163 = vector.broadcast %cst_50 : f32 to vector<8x64xf32>
    %164 = arith.addf %162, %163 : vector<8x64xf32>
    %165 = vector.extract_strided_slice %159 {offsets = [0, 64], sizes = [8, 64], strides = [1, 1]} : vector<8x256xf32> to vector<8x64xf32>
    %cst_51 = arith.constant 5.000000e-01 : f32
    %166 = vector.broadcast %cst_51 : f32 to vector<8x64xf32>
    %167 = arith.mulf %166, %165 : vector<8x64xf32>
    %cst_52 = arith.constant 5.000000e-01 : f32
    %168 = vector.broadcast %cst_52 : f32 to vector<8x64xf32>
    %169 = arith.addf %167, %168 : vector<8x64xf32>
    %170 = vector.extract_strided_slice %159 {offsets = [0, 128], sizes = [8, 64], strides = [1, 1]} : vector<8x256xf32> to vector<8x64xf32>
    %171 = vector.extract_strided_slice %159 {offsets = [0, 192], sizes = [8, 64], strides = [1, 1]} : vector<8x256xf32> to vector<8x64xf32>
    %cst_53 = arith.constant 5.000000e-01 : f32
    %172 = vector.broadcast %cst_53 : f32 to vector<8x64xf32>
    %173 = arith.mulf %172, %171 : vector<8x64xf32>
    %cst_54 = arith.constant 5.000000e-01 : f32
    %174 = vector.broadcast %cst_54 : f32 to vector<8x64xf32>
    %175 = arith.addf %173, %174 : vector<8x64xf32>
    %176 = arith.mulf %169, %153 : vector<8x64xf32>
    %177 = arith.mulf %164, %170 : vector<8x64xf32>
    %178 = arith.addf %176, %177 : vector<8x64xf32>
    %179 = math.tanh %178 : vector<8x64xf32>
    %180 = arith.mulf %175, %179 : vector<8x64xf32>
    %cst_55 = arith.constant dense<0.000000e+00> : vector<8x256xf32>
    %181 = tpu.matmul %180, %3, %cst_55 {dimension_numbers = #tpu.dot_dimension_numbers<[1], [0], [0], [1], [0, 0, 1, 1], [], []>} : vector<8x64xf32>, vector<64x256xf32>, vector<8x256xf32> -> vector<8x256xf32>
    %182 = vector.extract_strided_slice %2 {offsets = [56, 0], sizes = [8, 256], strides = [1, 1]} : vector<64x256xf32> to vector<8x256xf32>
    %183 = arith.addf %181, %182 : vector<8x256xf32>
    %184 = math.tanh %183 : vector<8x256xf32>
    %185 = vector.extract_strided_slice %184 {offsets = [0, 0], sizes = [8, 64], strides = [1, 1]} : vector<8x256xf32> to vector<8x64xf32>
    %cst_56 = arith.constant 5.000000e-01 : f32
    %186 = vector.broadcast %cst_56 : f32 to vector<8x64xf32>
    %187 = arith.mulf %186, %185 : vector<8x64xf32>
    %cst_57 = arith.constant 5.000000e-01 : f32
    %188 = vector.broadcast %cst_57 : f32 to vector<8x64xf32>
    %189 = arith.addf %187, %188 : vector<8x64xf32>
    %190 = vector.extract_strided_slice %184 {offsets = [0, 64], sizes = [8, 64], strides = [1, 1]} : vector<8x256xf32> to vector<8x64xf32>
    %cst_58 = arith.constant 5.000000e-01 : f32
    %191 = vector.broadcast %cst_58 : f32 to vector<8x64xf32>
    %192 = arith.mulf %191, %190 : vector<8x64xf32>
    %cst_59 = arith.constant 5.000000e-01 : f32
    %193 = vector.broadcast %cst_59 : f32 to vector<8x64xf32>
    %194 = arith.addf %192, %193 : vector<8x64xf32>
    %195 = vector.extract_strided_slice %184 {offsets = [0, 128], sizes = [8, 64], strides = [1, 1]} : vector<8x256xf32> to vector<8x64xf32>
    %196 = vector.extract_strided_slice %184 {offsets = [0, 192], sizes = [8, 64], strides = [1, 1]} : vector<8x256xf32> to vector<8x64xf32>
    %cst_60 = arith.constant 5.000000e-01 : f32
    %197 = vector.broadcast %cst_60 : f32 to vector<8x64xf32>
    %198 = arith.mulf %197, %196 : vector<8x64xf32>
    %cst_61 = arith.constant 5.000000e-01 : f32
    %199 = vector.broadcast %cst_61 : f32 to vector<8x64xf32>
    %200 = arith.addf %198, %199 : vector<8x64xf32>
    %201 = arith.mulf %194, %178 : vector<8x64xf32>
    %202 = arith.mulf %189, %195 : vector<8x64xf32>
    %203 = arith.addf %201, %202 : vector<8x64xf32>
    %204 = math.tanh %203 : vector<8x64xf32>
    %205 = arith.mulf %200, %204 : vector<8x64xf32>
    %c0_62 = arith.constant 0 : index
    %c0_63 = arith.constant 0 : index
    %206 = vector.load %arg2[%c0_62, %c0_63] : memref<120x32xf32, #tpu.memory_space<vmem>>, vector<64x32xf32>
    %c64 = arith.constant 64 : index
    %c0_64 = arith.constant 0 : index
    %207 = vector.load %arg2[%c64, %c0_64] : memref<120x32xf32, #tpu.memory_space<vmem>>, vector<8x32xf32>
    %c72 = arith.constant 72 : index
    %c0_65 = arith.constant 0 : index
    %208 = vector.load %arg2[%c72, %c0_65] : memref<120x32xf32, #tpu.memory_space<vmem>>, vector<32x32xf32>
    %c104 = arith.constant 104 : index
    %c0_66 = arith.constant 0 : index
    %209 = vector.load %arg2[%c104, %c0_66] : memref<120x32xf32, #tpu.memory_space<vmem>>, vector<8x32xf32>
    %c112 = arith.constant 112 : index
    %c0_67 = arith.constant 0 : index
    %210 = vector.load %arg2[%c112, %c0_67] : memref<120x32xf32, #tpu.memory_space<vmem>>, vector<8x32xf32>
    %cst_68 = arith.constant dense<0.000000e+00> : vector<8x32xf32>
    %211 = tpu.matmul %205, %206, %cst_68 {dimension_numbers = #tpu.dot_dimension_numbers<[1], [0], [0], [1], [0, 0, 1, 1], [], []>} : vector<8x64xf32>, vector<64x32xf32>, vector<8x32xf32> -> vector<8x32xf32>
    %212 = arith.addf %211, %207 : vector<8x32xf32>
    %cst_69 = arith.constant 0.000000e+00 : f32
    %213 = vector.broadcast %cst_69 : f32 to vector<8x32xf32>
    %214 = arith.maximumf %212, %213 : vector<8x32xf32>
    %215 = vector.broadcast %cst_69 : f32 to vector<8x32xf32>
    %216 = arith.subf %212, %215 : vector<8x32xf32>
    %217 = arith.cmpf one, %216, %216 : vector<8x32xf32>
    %218 = vector.broadcast %cst_69 : f32 to vector<8x32xf32>
    %219 = arith.addf %212, %218 : vector<8x32xf32>
    %220 = math.absf %216 : vector<8x32xf32>
    %cst_70 = arith.constant 0.000000e+00 : f32
    %221 = vector.broadcast %cst_70 : f32 to vector<8x32xf32>
    %222 = arith.subf %221, %220 : vector<8x32xf32>
    %223 = math.exp %222 : vector<8x32xf32>
    %224 = math.log1p %223 : vector<8x32xf32>
    %225 = arith.addf %214, %224 : vector<8x32xf32>
    %226 = arith.select %217, %219, %225 : vector<8x32xi1>, vector<8x32xf32>
    %cst_71 = arith.constant dense<0.000000e+00> : vector<8x32xf32>
    %227 = tpu.matmul %226, %208, %cst_71 {dimension_numbers = #tpu.dot_dimension_numbers<[1], [0], [0], [1], [0, 0, 1, 1], [], []>} : vector<8x32xf32>, vector<32x32xf32>, vector<8x32xf32> -> vector<8x32xf32>
    %228 = arith.addf %227, %209 : vector<8x32xf32>
    %229 = vector.extract_strided_slice %228 {offsets = [0, 0], sizes = [8, 8], strides = [1, 1]} : vector<8x32xf32> to vector<8x8xf32>
    %230 = vector.extract_strided_slice %228 {offsets = [0, 8], sizes = [8, 8], strides = [1, 1]} : vector<8x32xf32> to vector<8x8xf32>
    %231 = math.exp %230 : vector<8x8xf32>
    %232 = vector.extract_strided_slice %210 {offsets = [0, 0], sizes = [8, 8], strides = [1, 1]} : vector<8x32xf32> to vector<8x8xf32>
    %233 = arith.mulf %231, %232 : vector<8x8xf32>
    %234 = arith.addf %229, %233 : vector<8x8xf32>
    %c0_72 = arith.constant 0 : index
    %c0_73 = arith.constant 0 : index
    %235 = vector.load %arg3[%c0_72, %c0_73] : memref<8x8xf32, #tpu.memory_space<vmem>>, vector<8x8xf32>
    tpu.vector_store %arg3[%c0_72, %c0_73], %234 {strides = array<i32>} : memref<8x8xf32, #tpu.memory_space<vmem>>, vector<8x8xf32>,
    return
  }
}

</mosaic_0001>

<llo_original>
// kernel: tpu_custom_call.1
$region0: #{tpu_custom_call.1}
  #allocation0 [shape = 'u32[]', space=smem, size = 0x4, offset = 0x4, fixed_abs, tag = 'smem constant byte address 0x4 - core index']
  #allocation1 [shape = 'u32[144,128]{1,0:T(1,128)}', space=vmem, size = 0x12000, scoped, tag = 'internal scratch']
  %s0 = inlined_call_operand.vmem [shape: f32[64,16], index: 0, kind: input, shape index: {}]
  %s1 = inlined_call_operand.vmem [shape: f32[80,256], index: 1, kind: input, shape index: {}]
  %s2 = inlined_call_operand.vmem [shape: f32[120,32], index: 2, kind: input, shape index: {}]
  %s3 = inlined_call_operand.hbm [shape: f32[8,8], index: 3, kind: output, shape index: {}]
  %s4 = sld [smem:[#allocation0]]
  $region22: #{tpu_custom_call.1} parent=0
    _
  %s6 = ssub.s32 1, %s4
  %s7 = scalar_select 0, %s6, %s4
  $region1: #{tpu_custom_call.1} parent=0
    #allocation2 [shape = 'u8[4096]{0}', space=vmem, size = 0x1000, scoped, tag = 'output window, operand 0, single buffered']
    #allocation3 [shape = 's32[1]{0}', space=sflag, size = 0x4, scoped, tag = 'scoped memory for tpu_custom_call.1']
    %8 = vsyncpa [#allocation3], 0
    // Predicated region
    $region2: #{tpu_custom_call.1} parent=1 // pred_check
      _
    $region3: #{tpu_custom_call.1} parent=1 // pred_check_branch
      %10 = sbr.rel (0) target = $region5
    $region4: #{tpu_custom_call.1} parent=1 // pred_region
      _
    $region5: #{tpu_custom_call.1} parent=1 // pred_fallthru
      _
    // Predicated region
    $region6: #{tpu_custom_call.1} parent=1 // pred_check
      _
    $region7: #{tpu_custom_call.1} parent=1 // pred_check_branch
      %12 = sbr.rel (0) target = $region9
    $region8: #{tpu_custom_call.1} parent=1 // pred_region
      _
    $region9: #{tpu_custom_call.1} parent=1 // pred_fallthru
      _
    // Predicated region
    $region10: #{tpu_custom_call.1} parent=1 // pred_check
      _
    $region11: #{tpu_custom_call.1} parent=1 // pred_check_branch
      %14 = sbr.rel (0) target = $region13
    $region12: #{tpu_custom_call.1} parent=1 // pred_region
      _
    $region13: #{tpu_custom_call.1} parent=1 // pred_fallthru
      _
    %v15 = vld [vmem:[%s0] sm:$0xff]
    %v16 = vld [vmem:[%s0 + $0x8] sm:$0xff]
    %v17 = vld [vmem:[%s0 + $0x10] sm:$0xff]
    %v18 = vld [vmem:[%s0 + $0x18] sm:$0xff]
    %v19 = vld [vmem:[%s0 + $0x20] sm:$0xff]
    %v20 = vld [vmem:[%s0 + $0x28] sm:$0xff]
    %v21 = vld [vmem:[%s0 + $0x30] sm:$0xff]
    %v22 = vld [vmem:[%s0 + $0x38] sm:$0xff]
    %v23 = vld [vmem:[%s1] sm:$0xff]
    %v24 = vld [vmem:[%s1 + $0x8] sm:$0xff]
    %v25 = vld [vmem:[%s1 + $0x10] sm:$0xff]
    %v26 = vld [vmem:[%s1 + $0x18] sm:$0xff]
    %vm27 = vcmask 130048
    %v29 = vsel %vm27, %v15, 0
    %v32 = vsel %vm27, %v16, 0
    %v35 = vsel %vm27, %v17, 0
    %v38 = vsel %vm27, %v18, 0
    %v41 = vsel %vm27, %v19, 0
    %v44 = vsel %vm27, %v20, 0
    %v47 = vsel %vm27, %v21, 0
    %v50 = vsel %vm27, %v22, 0
    %52 = vmatprep.subr.mxu0 %v24
    %53 = vmatpush1.msra.mxu0 %v23
    %54 = vmatprep.subr.mxu0 %v26
    %55 = vmatpush1.msra.mxu0 %v25
    %56 = vmatprep.subr.mxu0 0.0
    %57 = vmatpush1.msra.mxu0 0.0
    %58 = vmatprep.subr.mxu0 0.0
    %59 = vmatpush1.msra.mxu0 0.0
    %60 = vmatprep.subr.mxu0 0.0
    %61 = vmatpush1.msra.mxu0 0.0
    %62 = vmatprep.subr.mxu0 0.0
    %63 = vmatpush1.msra.mxu0 0.0
    %64 = vmatprep.subr.mxu0 0.0
    %65 = vmatpush1.msra.mxu0 0.0
    %66 = vmatprep.subr.mxu0 0.0
    %67 = vmatpush1.msra.mxu0 0.0
    %68 = vmatprep.subr.mxu0 0.0
    %69 = vmatpush1.msra.mxu0 0.0
    %70 = vmatprep.subr.mxu0 0.0
    %71 = vmatpush1.msra.mxu0 0.0
    %72 = vmatprep.subr.mxu0 0.0
    %73 = vmatpush1.msra.mxu0 0.0
    %74 = vmatprep.subr.mxu0 0.0
    %75 = vmatpush1.msra.mxu0 0.0
    %76 = vmatprep.subr.mxu0 0.0
    %77 = vmatpush1.msra.mxu0 0.0
    %78 = vmatprep.subr.mxu0 0.0
    %79 = vmatpush1.msra.mxu0 0.0
    %80 = vmatprep.subr.mxu0 0.0
    %81 = vmatpush1.msra.mxu0 0.0
    %82 = vmatprep.subr.mxu0 0.0
    %83 = vmatpush1.msra.mxu0 0.0
    %84 = vmatprep.subr.mxu0 0.0
    %85 = vmatpush1.msra.mxu0 0.0
    %86 = vmatprep.subr.mxu0 0.0
    %87 = vmatpush1.msra.mxu0 0.0
    %88 = vmatprep.subr.mxu0 0.0
    %89 = vmatpush1.msra.mxu0 0.0
    %90 = vmatprep.subr.mxu0 0.0
    %91 = vmatpush1.msra.mxu0 0.0
    %92 = vmatprep.subr.mxu0 0.0
    %93 = vmatpush1.msra.mxu0 0.0
    %94 = vmatprep.subr.mxu0 0.0
    %95 = vmatpush1.msra.mxu0 0.0
    %96 = vmatprep.subr.mxu0 0.0
    %97 = vmatpush1.msra.mxu0 0.0
    %98 = vmatprep.subr.mxu0 0.0
    %99 = vmatpush1.msra.mxu0 0.0
    %100 = vmatprep.subr.mxu0 0.0
    %101 = vmatpush1.msra.mxu0 0.0
    %102 = vmatprep.subr.mxu0 0.0
    %103 = vmatpush1.msra.mxu0 0.0
    %104 = vmatprep.subr.mxu0 0.0
    %105 = vmatpush1.msra.mxu0 0.0
    %106 = vmatprep.subr.mxu0 0.0
    %107 = vmatpush1.msra.mxu0 0.0
    %108 = vmatprep.subr.mxu0 0.0
    %109 = vmatpush1.msra.mxu0 0.0
    %110 = vmatprep.subr.mxu0 0.0
    %111 = vmatpush1.msra.mxu0 0.0
    %112 = vmatprep.subr.mxu0 0.0
    %113 = vmatpush1.msra.mxu0 0.0
    %114 = vmatprep.subr.mxu0 0.0
    %115 = vmatpush1.msra.mxu0 0.0
    %116 = vmatprep.mubr.f32.mxu0 0.0
    %117 = vmatmul.mubr.f32.gmra.mrb[0].mxu0 %v29
    %v118 = vpop.f32.mrb[0].mxu0
    %v119 = vadd.f32 0.0, %v118
    %v120 = vpop.f32.mrb[0].mxu0
    %v121 = vadd.f32 0.0, %v120
    %122 = vmatprep.mubr.f32.mxu0 0.0
    %123 = vmatmul.mubr.f32.gmra.mrb[0].mxu0 %v32
    %v124 = vpop.f32.mrb[0].mxu0
    %v125 = vadd.f32 0.0, %v124
    %v126 = vpop.f32.mrb[0].mxu0
    %v127 = vadd.f32 0.0, %v126
    %128 = vmatprep.mubr.f32.mxu0 0.0
    %129 = vmatmul.mubr.f32.gmra.mrb[0].mxu0 %v35
    %v130 = vpop.f32.mrb[0].mxu0
    %v131 = vadd.f32 0.0, %v130
    %v132 = vpop.f32.mrb[0].mxu0
    %v133 = vadd.f32 0.0, %v132
    %134 = vmatprep.mubr.f32.mxu0 0.0
    %135 = vmatmul.mubr.f32.gmra.mrb[0].mxu0 %v38
    %v136 = vpop.f32.mrb[0].mxu0
    %v137 = vadd.f32 0.0, %v136
    %v138 = vpop.f32.mrb[0].mxu0
    %v139 = vadd.f32 0.0, %v138
    %140 = vmatprep.mubr.f32.mxu0 0.0
    %141 = vmatmul.mubr.f32.gmra.mrb[0].mxu0 %v41
    %v142 = vpop.f32.mrb[0].mxu0
    %v143 = vadd.f32 0.0, %v142
    %v144 = vpop.f32.mrb[0].mxu0
    %v145 = vadd.f32 0.0, %v144
    %146 = vmatprep.mubr.f32.mxu0 0.0
    %147 = vmatmul.mubr.f32.gmra.mrb[0].mxu0 %v44
    %v148 = vpop.f32.mrb[0].mxu0
    %v149 = vadd.f32 0.0, %v148
    %v150 = vpop.f32.mrb[0].mxu0
    %v151 = vadd.f32 0.0, %v150
    %152 = vmatprep.mubr.f32.mxu0 0.0
    %153 = vmatmul.mubr.f32.gmra.mrb[0].mxu0 %v47
    %v154 = vpop.f32.mrb[0].mxu0
    %v155 = vadd.f32 0.0, %v154
    %v156 = vpop.f32.mrb[0].mxu0
    %v157 = vadd.f32 0.0, %v156
    %158 = vmatprep.mubr.f32.mxu0 0.0
    %159 = vmatmul.mubr.f32.gmra.mrb[0].mxu0 %v50
    %v160 = vpop.f32.mrb[0].mxu0
    %v161 = vadd.f32 0.0, %v160
    %v162 = vpop.f32.mrb[0].mxu0
    %v163 = vadd.f32 0.0, %v162
    %164 = vdwg.mxu0
    %v165 = vld [vmem:[%s1 + $0x20] sm:$0xff]
    %v166 = vld [vmem:[%s1 + $0x28] sm:$0xff]
    %v167 = vld [vmem:[%s1 + $0x30] sm:$0xff]
    %v168 = vld [vmem:[%s1 + $0x38] sm:$0xff]
    %v169 = vld [vmem:[%s1 + $0x40] sm:$0xff]
    %v170 = vld [vmem:[%s1 + $0x48] sm:$0xff]
    %v171 = vld [vmem:[%s1 + $0x50] sm:$0xff]
    %v172 = vld [vmem:[%s1 + $0x58] sm:$0xff]
    %v173 = vld [vmem:[%s1 + $0x60] sm:$0xff]
    %v174 = vld [vmem:[%s1 + $0x68] sm:$0xff]
    %v175 = vld [vmem:[%s1 + $0x70] sm:$0xff]
    %v176 = vld [vmem:[%s1 + $0x78] sm:$0xff]
    %v177 = vld [vmem:[%s1 + $0x80] sm:$0xff]
    %v178 = vld [vmem:[%s1 + $0x88] sm:$0xff]
    %v179 = vld [vmem:[%s1 + $0x90] sm:$0xff]
    %v180 = vld [vmem:[%s1 + $0x98] sm:$0xff]
    %vm181 = vcmask 523264
    %v183 = vsel %vm181, 0.0, 0
    %185 = vmatprep.subr.mxu0 %v166
    %186 = vmatpush1.msra.mxu0 %v165
    %187 = vmatprep.subr.mxu0 %v168
    %188 = vmatpush1.msra.mxu0 %v167
    %189 = vmatprep.subr.mxu0 %v170
    %190 = vmatpush1.msra.mxu0 %v169
    %191 = vmatprep.subr.mxu0 %v172
    %192 = vmatpush1.msra.mxu0 %v171
    %193 = vmatprep.subr.mxu0 %v174
    %194 = vmatpush1.msra.mxu0 %v173
    %195 = vmatprep.subr.mxu0 %v176
    %196 = vmatpush1.msra.mxu0 %v175
    %197 = vmatprep.subr.mxu0 %v178
    %198 = vmatpush1.msra.mxu0 %v177
    %199 = vmatprep.subr.mxu0 %v180
    %200 = vmatpush1.msra.mxu0 %v179
    %201 = vmatprep.subr.mxu0 0.0
    %202 = vmatpush1.msra.mxu0 0.0
    %203 = vmatprep.subr.mxu0 0.0
    %204 = vmatpush1.msra.mxu0 0.0
    %205 = vmatprep.subr.mxu0 0.0
    %206 = vmatpush1.msra.mxu0 0.0
    %207 = vmatprep.subr.mxu0 0.0
    %208 = vmatpush1.msra.mxu0 0.0
    %209 = vmatprep.subr.mxu0 0.0
    %210 = vmatpush1.msra.mxu0 0.0
    %211 = vmatprep.subr.mxu0 0.0
    %212 = vmatpush1.msra.mxu0 0.0
    %213 = vmatprep.subr.mxu0 0.0
    %214 = vmatpush1.msra.mxu0 0.0
    %215 = vmatprep.subr.mxu0 0.0
    %216 = vmatpush1.msra.mxu0 0.0
    %217 = vmatprep.subr.mxu0 0.0
    %218 = vmatpush1.msra.mxu0 0.0
    %219 = vmatprep.subr.mxu0 0.0
    %220 = vmatpush1.msra.mxu0 0.0
    %221 = vmatprep.subr.mxu0 0.0
    %222 = vmatpush1.msra.mxu0 0.0
    %223 = vmatprep.subr.mxu0 0.0
    %224 = vmatpush1.msra.mxu0 0.0
    %225 = vmatprep.subr.mxu0 0.0
    %226 = vmatpush1.msra.mxu0 0.0
    %227 = vmatprep.subr.mxu0 0.0
    %228 = vmatpush1.msra.mxu0 0.0
    %229 = vmatprep.subr.mxu0 0.0
    %230 = vmatpush1.msra.mxu0 0.0
    %231 = vmatprep.subr.mxu0 0.0
    %232 = vmatpush1.msra.mxu0 0.0
    %233 = vmatprep.subr.mxu0 0.0
    %234 = vmatpush1.msra.mxu0 0.0
    %235 = vmatprep.subr.mxu0 0.0
    %236 = vmatpush1.msra.mxu0 0.0
    %237 = vmatprep.subr.mxu0 0.0
    %238 = vmatpush1.msra.mxu0 0.0
    %239 = vmatprep.subr.mxu0 0.0
    %240 = vmatpush1.msra.mxu0 0.0
    %241 = vmatprep.subr.mxu0 0.0
    %242 = vmatpush1.msra.mxu0 0.0
    %243 = vmatprep.subr.mxu0 0.0
    %244 = vmatpush1.msra.mxu0 0.0
    %245 = vmatprep.subr.mxu0 0.0
    %246 = vmatpush1.msra.mxu0 0.0
    %247 = vmatprep.subr.mxu0 0.0
    %248 = vmatpush1.msra.mxu0 0.0
    %249 = vmatprep.mubr.f32.mxu0 0.0
    %250 = vmatmul.mubr.f32.gmra.mrb[0].mxu0 %v183
    %v251 = vpop.f32.mrb[0].mxu0
    %v252 = vadd.f32 %v119, %v251
    %v253 = vpop.f32.mrb[0].mxu0
    %v254 = vadd.f32 %v121, %v253
    %255 = vdwg.mxu0
    %v256 = vtanh.pop %v252
    %v257 = vtanh.pop %v254
    %v258 = vmul.f32 %v256, 0.5
    %v259 = vadd.f32 %v258, 0.5
    %v260 = vmul.f32 %v257, 0.5
    %v261 = vadd.f32 %v260, 0.5
    %v262 = vmul.f32 %v259, 0.0
    %v263 = vmul.f32 %v259, %v257
    %265 = vrot.lane.b32.xlu0 %v263, 64
    %v266 = vpop.permute.xlu0 %265
    %v268 = vadd.f32 %v262, %v266
    %v269 = vtanh.pop %v268
    %v270 = vmul.f32 %v261, %v269
    %272 = vrot.lane.b32.xlu0 %v270, 64
    %v273 = vpop.permute.xlu0 %272
    %v274 = vsel %vm181, %v273, 0
    %276 = vmatprep.subr.mxu0 %v166
    %277 = vmatpush1.msra.mxu0 %v165
    %278 = vmatprep.subr.mxu0 %v168
    %279 = vmatpush1.msra.mxu0 %v167
    %280 = vmatprep.subr.mxu0 %v170
    %281 = vmatpush1.msra.mxu0 %v169
    %282 = vmatprep.subr.mxu0 %v172
    %283 = vmatpush1.msra.mxu0 %v171
    %284 = vmatprep.subr.mxu0 %v174
    %285 = vmatpush1.msra.mxu0 %v173
    %286 = vmatprep.subr.mxu0 %v176
    %287 = vmatpush1.msra.mxu0 %v175
    %288 = vmatprep.subr.mxu0 %v178
    %289 = vmatpush1.msra.mxu0 %v177
    %290 = vmatprep.subr.mxu0 %v180
    %291 = vmatpush1.msra.mxu0 %v179
    %292 = vmatprep.subr.mxu0 0.0
    %293 = vmatpush1.msra.mxu0 0.0
    %294 = vmatprep.subr.mxu0 0.0
    %295 = vmatpush1.msra.mxu0 0.0
    %296 = vmatprep.subr.mxu0 0.0
    %297 = vmatpush1.msra.mxu0 0.0
    %298 = vmatprep.subr.mxu0 0.0
    %299 = vmatpush1.msra.mxu0 0.0
    %300 = vmatprep.subr.mxu0 0.0
    %301 = vmatpush1.msra.mxu0 0.0
    %302 = vmatprep.subr.mxu0 0.0
    %303 = vmatpush1.msra.mxu0 0.0
    %304 = vmatprep.subr.mxu0 0.0
    %305 = vmatpush1.msra.mxu0 0.0
    %306 = vmatprep.subr.mxu0 0.0
    %307 = vmatpush1.msra.mxu0 0.0
    %308 = vmatprep.subr.mxu0 0.0
    %309 = vmatpush1.msra.mxu0 0.0
    %310 = vmatprep.subr.mxu0 0.0
    %311 = vmatpush1.msra.mxu0 0.0
    %312 = vmatprep.subr.mxu0 0.0
    %313 = vmatpush1.msra.mxu0 0.0
    %314 = vmatprep.subr.mxu0 0.0
    %315 = vmatpush1.msra.mxu0 0.0
    %316 = vmatprep.subr.mxu0 0.0
    %317 = vmatpush1.msra.mxu0 0.0
    %318 = vmatprep.subr.mxu0 0.0
    %319 = vmatpush1.msra.mxu0 0.0
    %320 = vmatprep.subr.mxu0 0.0
    %321 = vmatpush1.msra.mxu0 0.0
    %322 = vmatprep.subr.mxu0 0.0
    %323 = vmatpush1.msra.mxu0 0.0
    %324 = vmatprep.subr.mxu0 0.0
    %325 = vmatpush1.msra.mxu0 0.0
    %326 = vmatprep.subr.mxu0 0.0
    %327 = vmatpush1.msra.mxu0 0.0
    %328 = vmatprep.subr.mxu0 0.0
    %329 = vmatpush1.msra.mxu0 0.0
    %330 = vmatprep.subr.mxu0 0.0
    %331 = vmatpush1.msra.mxu0 0.0
    %332 = vmatprep.subr.mxu0 0.0
    %333 = vmatpush1.msra.mxu0 0.0
    %334 = vmatprep.subr.mxu0 0.0
    %335 = vmatpush1.msra.mxu0 0.0
    %336 = vmatprep.subr.mxu0 0.0
    %337 = vmatpush1.msra.mxu0 0.0
    %338 = vmatprep.subr.mxu0 0.0
    %339 = vmatpush1.msra.mxu0 0.0
    %340 = vmatprep.mubr.f32.mxu0 0.0
    %341 = vmatmul.mubr.f32.gmra.mrb[0].mxu0 %v274
    %v342 = vpop.f32.mrb[0].mxu0
    %v343 = vadd.f32 %v125, %v342
    %v344 = vpop.f32.mrb[0].mxu0
    %v345 = vadd.f32 %v127, %v344
    %346 = vdwg.mxu0
    %v347 = vtanh.pop %v343
    %v348 = vtanh.pop %v345
    %v349 = vmul.f32 %v347, 0.5
    %v350 = vadd.f32 %v349, 0.5
    %v351 = vmul.f32 %v348, 0.5
    %v352 = vadd.f32 %v351, 0.5
    %v353 = vmul.f32 %v350, %v268
    %v354 = vmul.f32 %v350, %v348
    %356 = vrot.lane.b32.xlu0 %v354, 64
    %v357 = vpop.permute.xlu0 %356
    %v359 = vadd.f32 %v353, %v357
    %v360 = vtanh.pop %v359
    %v361 = vmul.f32 %v352, %v360
    %363 = vrot.lane.b32.xlu0 %v361, 64
    %v364 = vpop.permute.xlu0 %363
    %v365 = vsel %vm181, %v364, 0
    %367 = vmatprep.subr.mxu0 %v166
    %368 = vmatpush1.msra.mxu0 %v165
    %369 = vmatprep.subr.mxu0 %v168
    %370 = vmatpush1.msra.mxu0 %v167
    %371 = vmatprep.subr.mxu0 %v170
    %372 = vmatpush1.msra.mxu0 %v169
    %373 = vmatprep.subr.mxu0 %v172
    %374 = vmatpush1.msra.mxu0 %v171
    %375 = vmatprep.subr.mxu0 %v174
    %376 = vmatpush1.msra.mxu0 %v173
    %377 = vmatprep.subr.mxu0 %v176
    %378 = vmatpush1.msra.mxu0 %v175
    %379 = vmatprep.subr.mxu0 %v178
    %380 = vmatpush1.msra.mxu0 %v177
    %381 = vmatprep.subr.mxu0 %v180
    %382 = vmatpush1.msra.mxu0 %v179
    %383 = vmatprep.subr.mxu0 0.0
    %384 = vmatpush1.msra.mxu0 0.0
    %385 = vmatprep.subr.mxu0 0.0
    %386 = vmatpush1.msra.mxu0 0.0
    %387 = vmatprep.subr.mxu0 0.0
    %388 = vmatpush1.msra.mxu0 0.0
    %389 = vmatprep.subr.mxu0 0.0
    %390 = vmatpush1.msra.mxu0 0.0
    %391 = vmatprep.subr.mxu0 0.0
    %392 = vmatpush1.msra.mxu0 0.0
    %393 = vmatprep.subr.mxu0 0.0
    %394 = vmatpush1.msra.mxu0 0.0
    %395 = vmatprep.subr.mxu0 0.0
    %396 = vmatpush1.msra.mxu0 0.0
    %397 = vmatprep.subr.mxu0 0.0
    %398 = vmatpush1.msra.mxu0 0.0
    %399 = vmatprep.subr.mxu0 0.0
    %400 = vmatpush1.msra.mxu0 0.0
    %401 = vmatprep.subr.mxu0 0.0
    %402 = vmatpush1.msra.mxu0 0.0
    %403 = vmatprep.subr.mxu0 0.0
    %404 = vmatpush1.msra.mxu0 0.0
    %405 = vmatprep.subr.mxu0 0.0
    %406 = vmatpush1.msra.mxu0 0.0
    %407 = vmatprep.subr.mxu0 0.0
    %408 = vmatpush1.msra.mxu0 0.0
    %409 = vmatprep.subr.mxu0 0.0
    %410 = vmatpush1.msra.mxu0 0.0
    %411 = vmatprep.subr.mxu0 0.0
    %412 = vmatpush1.msra.mxu0 0.0
    %413 = vmatprep.subr.mxu0 0.0
    %414 = vmatpush1.msra.mxu0 0.0
    %415 = vmatprep.subr.mxu0 0.0
    %416 = vmatpush1.msra.mxu0 0.0
    %417 = vmatprep.subr.mxu0 0.0
    %418 = vmatpush1.msra.mxu0 0.0
    %419 = vmatprep.subr.mxu0 0.0
    %420 = vmatpush1.msra.mxu0 0.0
    %421 = vmatprep.subr.mxu0 0.0
    %422 = vmatpush1.msra.mxu0 0.0
    %423 = vmatprep.subr.mxu0 0.0
    %424 = vmatpush1.msra.mxu0 0.0
    %425 = vmatprep.subr.mxu0 0.0
    %426 = vmatpush1.msra.mxu0 0.0
    %427 = vmatprep.subr.mxu0 0.0
    %428 = vmatpush1.msra.mxu0 0.0
    %429 = vmatprep.subr.mxu0 0.0
    %430 = vmatpush1.msra.mxu0 0.0
    %431 = vmatprep.mubr.f32.mxu0 0.0
    %432 = vmatmul.mubr.f32.gmra.mrb[0].mxu0 %v365
    %v433 = vpop.f32.mrb[0].mxu0
    %v434 = vadd.f32 %v131, %v433
    %v435 = vpop.f32.mrb[0].mxu0
    %v436 = vadd.f32 %v133, %v435
    %437 = vdwg.mxu0
    %v438 = vtanh.pop %v434
    %v439 = vtanh.pop %v436
    %v440 = vmul.f32 %v438, 0.5
    %v441 = vadd.f32 %v440, 0.5
    %v442 = vmul.f32 %v439, 0.5
    %v443 = vadd.f32 %v442, 0.5
    %v444 = vmul.f32 %v441, %v359
    %v445 = vmul.f32 %v441, %v439
    %447 = vrot.lane.b32.xlu0 %v445, 64
    %v448 = vpop.permute.xlu0 %447
    %v450 = vadd.f32 %v444, %v448
    %v451 = vtanh.pop %v450
    %v452 = vmul.f32 %v443, %v451
    %454 = vrot.lane.b32.xlu0 %v452, 64
    %v455 = vpop.permute.xlu0 %454
    %v456 = vsel %vm181, %v455, 0
    %458 = vmatprep.subr.mxu0 %v166
    %459 = vmatpush1.msra.mxu0 %v165
    %460 = vmatprep.subr.mxu0 %v168
    %461 = vmatpush1.msra.mxu0 %v167
    %462 = vmatprep.subr.mxu0 %v170
    %463 = vmatpush1.msra.mxu0 %v169
    %464 = vmatprep.subr.mxu0 %v172
    %465 = vmatpush1.msra.mxu0 %v171
    %466 = vmatprep.subr.mxu0 %v174
    %467 = vmatpush1.msra.mxu0 %v173
    %468 = vmatprep.subr.mxu0 %v176
    %469 = vmatpush1.msra.mxu0 %v175
    %470 = vmatprep.subr.mxu0 %v178
    %471 = vmatpush1.msra.mxu0 %v177
    %472 = vmatprep.subr.mxu0 %v180
    %473 = vmatpush1.msra.mxu0 %v179
    %474 = vmatprep.subr.mxu0 0.0
    %475 = vmatpush1.msra.mxu0 0.0
    %476 = vmatprep.subr.mxu0 0.0
    %477 = vmatpush1.msra.mxu0 0.0
    %478 = vmatprep.subr.mxu0 0.0
    %479 = vmatpush1.msra.mxu0 0.0
    %480 = vmatprep.subr.mxu0 0.0
    %481 = vmatpush1.msra.mxu0 0.0
    %482 = vmatprep.subr.mxu0 0.0
    %483 = vmatpush1.msra.mxu0 0.0
    %484 = vmatprep.subr.mxu0 0.0
    %485 = vmatpush1.msra.mxu0 0.0
    %486 = vmatprep.subr.mxu0 0.0
    %487 = vmatpush1.msra.mxu0 0.0
    %488 = vmatprep.subr.mxu0 0.0
    %489 = vmatpush1.msra.mxu0 0.0
    %490 = vmatprep.subr.mxu0 0.0
    %491 = vmatpush1.msra.mxu0 0.0
    %492 = vmatprep.subr.mxu0 0.0
    %493 = vmatpush1.msra.mxu0 0.0
    %494 = vmatprep.subr.mxu0 0.0
    %495 = vmatpush1.msra.mxu0 0.0
    %496 = vmatprep.subr.mxu0 0.0
    %497 = vmatpush1.msra.mxu0 0.0
    %498 = vmatprep.subr.mxu0 0.0
    %499 = vmatpush1.msra.mxu0 0.0
    %500 = vmatprep.subr.mxu0 0.0
    %501 = vmatpush1.msra.mxu0 0.0
    %502 = vmatprep.subr.mxu0 0.0
    %503 = vmatpush1.msra.mxu0 0.0
    %504 = vmatprep.subr.mxu0 0.0
    %505 = vmatpush1.msra.mxu0 0.0
    %506 = vmatprep.subr.mxu0 0.0
    %507 = vmatpush1.msra.mxu0 0.0
    %508 = vmatprep.subr.mxu0 0.0
    %509 = vmatpush1.msra.mxu0 0.0
    %510 = vmatprep.subr.mxu0 0.0
    %511 = vmatpush1.msra.mxu0 0.0
    %512 = vmatprep.subr.mxu0 0.0
    %513 = vmatpush1.msra.mxu0 0.0
    %514 = vmatprep.subr.mxu0 0.0
    %515 = vmatpush1.msra.mxu0 0.0
    %516 = vmatprep.subr.mxu0 0.0
    %517 = vmatpush1.msra.mxu0 0.0
    %518 = vmatprep.subr.mxu0 0.0
    %519 = vmatpush1.msra.mxu0 0.0
    %520 = vmatprep.subr.mxu0 0.0
    %521 = vmatpush1.msra.mxu0 0.0
    %522 = vmatprep.mubr.f32.mxu0 0.0
    %523 = vmatmul.mubr.f32.gmra.mrb[0].mxu0 %v456
    %v524 = vpop.f32.mrb[0].mxu0
    %v525 = vadd.f32 %v137, %v524
    %v526 = vpop.f32.mrb[0].mxu0
    %v527 = vadd.f32 %v139, %v526
    %528 = vdwg.mxu0
    %v529 = vtanh.pop %v525
    %v530 = vtanh.pop %v527
    %v531 = vmul.f32 %v529, 0.5
    %v532 = vadd.f32 %v531, 0.5
    %v533 = vmul.f32 %v530, 0.5
    %v534 = vadd.f32 %v533, 0.5
    %v535 = vmul.f32 %v532, %v450
    %v536 = vmul.f32 %v532, %v530
    %538 = vrot.lane.b32.xlu0 %v536, 64
    %v539 = vpop.permute.xlu0 %538
    %v541 = vadd.f32 %v535, %v539
    %v542 = vtanh.pop %v541
    %v543 = vmul.f32 %v534, %v542
    %545 = vrot.lane.b32.xlu0 %v543, 64
    %v546 = vpop.permute.xlu0 %545
    %v547 = vsel %vm181, %v546, 0
    %549 = vmatprep.subr.mxu0 %v166
    %550 = vmatpush1.msra.mxu0 %v165
    %551 = vmatprep.subr.mxu0 %v168
    %552 = vmatpush1.msra.mxu0 %v167
    %553 = vmatprep.subr.mxu0 %v170
    %554 = vmatpush1.msra.mxu0 %v169
    %555 = vmatprep.subr.mxu0 %v172
    %556 = vmatpush1.msra.mxu0 %v171
    %557 = vmatprep.subr.mxu0 %v174
    %558 = vmatpush1.msra.mxu0 %v173
    %559 = vmatprep.subr.mxu0 %v176
    %560 = vmatpush1.msra.mxu0 %v175
    %561 = vmatprep.subr.mxu0 %v178
    %562 = vmatpush1.msra.mxu0 %v177
    %563 = vmatprep.subr.mxu0 %v180
    %564 = vmatpush1.msra.mxu0 %v179
    %565 = vmatprep.subr.mxu0 0.0
    %566 = vmatpush1.msra.mxu0 0.0
    %567 = vmatprep.subr.mxu0 0.0
    %568 = vmatpush1.msra.mxu0 0.0
    %569 = vmatprep.subr.mxu0 0.0
    %570 = vmatpush1.msra.mxu0 0.0
    %571 = vmatprep.subr.mxu0 0.0
    %572 = vmatpush1.msra.mxu0 0.0
    %573 = vmatprep.subr.mxu0 0.0
    %574 = vmatpush1.msra.mxu0 0.0
    %575 = vmatprep.subr.mxu0 0.0
    %576 = vmatpush1.msra.mxu0 0.0
    %577 = vmatprep.subr.mxu0 0.0
    %578 = vmatpush1.msra.mxu0 0.0
    %579 = vmatprep.subr.mxu0 0.0
    %580 = vmatpush1.msra.mxu0 0.0
    %581 = vmatprep.subr.mxu0 0.0
    %582 = vmatpush1.msra.mxu0 0.0
    %583 = vmatprep.subr.mxu0 0.0
    %584 = vmatpush1.msra.mxu0 0.0
    %585 = vmatprep.subr.mxu0 0.0
    %586 = vmatpush1.msra.mxu0 0.0
    %587 = vmatprep.subr.mxu0 0.0
    %588 = vmatpush1.msra.mxu0 0.0
    %589 = vmatprep.subr.mxu0 0.0
    %590 = vmatpush1.msra.mxu0 0.0
    %591 = vmatprep.subr.mxu0 0.0
    %592 = vmatpush1.msra.mxu0 0.0
    %593 = vmatprep.subr.mxu0 0.0
    %594 = vmatpush1.msra.mxu0 0.0
    %595 = vmatprep.subr.mxu0 0.0
    %596 = vmatpush1.msra.mxu0 0.0
    %597 = vmatprep.subr.mxu0 0.0
    %598 = vmatpush1.msra.mxu0 0.0
    %599 = vmatprep.subr.mxu0 0.0
    %600 = vmatpush1.msra.mxu0 0.0
    %601 = vmatprep.subr.mxu0 0.0
    %602 = vmatpush1.msra.mxu0 0.0
    %603 = vmatprep.subr.mxu0 0.0
    %604 = vmatpush1.msra.mxu0 0.0
    %605 = vmatprep.subr.mxu0 0.0
    %606 = vmatpush1.msra.mxu0 0.0
    %607 = vmatprep.subr.mxu0 0.0
    %608 = vmatpush1.msra.mxu0 0.0
    %609 = vmatprep.subr.mxu0 0.0
    %610 = vmatpush1.msra.mxu0 0.0
    %611 = vmatprep.subr.mxu0 0.0
    %612 = vmatpush1.msra.mxu0 0.0
    %613 = vmatprep.mubr.f32.mxu0 0.0
    %614 = vmatmul.mubr.f32.gmra.mrb[0].mxu0 %v547
    %v615 = vpop.f32.mrb[0].mxu0
    %v616 = vadd.f32 %v143, %v615
    %v617 = vpop.f32.mrb[0].mxu0
    %v618 = vadd.f32 %v145, %v617
    %619 = vdwg.mxu0
    %v620 = vtanh.pop %v616
    %v621 = vtanh.pop %v618
    %v622 = vmul.f32 %v620, 0.5
    %v623 = vadd.f32 %v622, 0.5
    %v624 = vmul.f32 %v621, 0.5
    %v625 = vadd.f32 %v624, 0.5
    %v626 = vmul.f32 %v623, %v541
    %v627 = vmul.f32 %v623, %v621
    %629 = vrot.lane.b32.xlu0 %v627, 64
    %v630 = vpop.permute.xlu0 %629
    %v632 = vadd.f32 %v626, %v630
    %v633 = vtanh.pop %v632
    %v634 = vmul.f32 %v625, %v633
    %636 = vrot.lane.b32.xlu0 %v634, 64
    %v637 = vpop.permute.xlu0 %636
    %v638 = vsel %vm181, %v637, 0
    %640 = vmatprep.subr.mxu0 %v166
    %641 = vmatpush1.msra.mxu0 %v165
    %642 = vmatprep.subr.mxu0 %v168
    %643 = vmatpush1.msra.mxu0 %v167
    %644 = vmatprep.subr.mxu0 %v170
    %645 = vmatpush1.msra.mxu0 %v169
    %646 = vmatprep.subr.mxu0 %v172
    %647 = vmatpush1.msra.mxu0 %v171
    %648 = vmatprep.subr.mxu0 %v174
    %649 = vmatpush1.msra.mxu0 %v173
    %650 = vmatprep.subr.mxu0 %v176
    %651 = vmatpush1.msra.mxu0 %v175
    %652 = vmatprep.subr.mxu0 %v178
    %653 = vmatpush1.msra.mxu0 %v177
    %654 = vmatprep.subr.mxu0 %v180
    %655 = vmatpush1.msra.mxu0 %v179
    %656 = vmatprep.subr.mxu0 0.0
    %657 = vmatpush1.msra.mxu0 0.0
    %658 = vmatprep.subr.mxu0 0.0
    %659 = vmatpush1.msra.mxu0 0.0
    %660 = vmatprep.subr.mxu0 0.0
    %661 = vmatpush1.msra.mxu0 0.0
    %662 = vmatprep.subr.mxu0 0.0
    %663 = vmatpush1.msra.mxu0 0.0
    %664 = vmatprep.subr.mxu0 0.0
    %665 = vmatpush1.msra.mxu0 0.0
    %666 = vmatprep.subr.mxu0 0.0
    %667 = vmatpush1.msra.mxu0 0.0
    %668 = vmatprep.subr.mxu0 0.0
    %669 = vmatpush1.msra.mxu0 0.0
    %670 = vmatprep.subr.mxu0 0.0
    %671 = vmatpush1.msra.mxu0 0.0
    %672 = vmatprep.subr.mxu0 0.0
    %673 = vmatpush1.msra.mxu0 0.0
    %674 = vmatprep.subr.mxu0 0.0
    %675 = vmatpush1.msra.mxu0 0.0
    %676 = vmatprep.subr.mxu0 0.0
    %677 = vmatpush1.msra.mxu0 0.0
    %678 = vmatprep.subr.mxu0 0.0
    %679 = vmatpush1.msra.mxu0 0.0
    %680 = vmatprep.subr.mxu0 0.0
    %681 = vmatpush1.msra.mxu0 0.0
    %682 = vmatprep.subr.mxu0 0.0
    %683 = vmatpush1.msra.mxu0 0.0
    %684 = vmatprep.subr.mxu0 0.0
    %685 = vmatpush1.msra.mxu0 0.0
    %686 = vmatprep.subr.mxu0 0.0
    %687 = vmatpush1.msra.mxu0 0.0
    %688 = vmatprep.subr.mxu0 0.0
    %689 = vmatpush1.msra.mxu0 0.0
    %690 = vmatprep.subr.mxu0 0.0
    %691 = vmatpush1.msra.mxu0 0.0
    %692 = vmatprep.subr.mxu0 0.0
    %693 = vmatpush1.msra.mxu0 0.0
    %694 = vmatprep.subr.mxu0 0.0
    %695 = vmatpush1.msra.mxu0 0.0
    %696 = vmatprep.subr.mxu0 0.0
    %697 = vmatpush1.msra.mxu0 0.0
    %698 = vmatprep.subr.mxu0 0.0
    %699 = vmatpush1.msra.mxu0 0.0
    %700 = vmatprep.subr.mxu0 0.0
    %701 = vmatpush1.msra.mxu0 0.0
    %702 = vmatprep.subr.mxu0 0.0
    %703 = vmatpush1.msra.mxu0 0.0
    %704 = vmatprep.mubr.f32.mxu0 0.0
    %705 = vmatmul.mubr.f32.gmra.mrb[0].mxu0 %v638
    %v706 = vpop.f32.mrb[0].mxu0
    %v707 = vadd.f32 %v149, %v706
    %v708 = vpop.f32.mrb[0].mxu0
    %v709 = vadd.f32 %v151, %v708
    %710 = vdwg.mxu0
    %v711 = vtanh.pop %v707
    %v712 = vtanh.pop %v709
    %v713 = vmul.f32 %v711, 0.5
    %v714 = vadd.f32 %v713, 0.5
    %v715 = vmul.f32 %v712, 0.5
    %v716 = vadd.f32 %v715, 0.5
    %v717 = vmul.f32 %v714, %v632
    %v718 = vmul.f32 %v714, %v712
    %720 = vrot.lane.b32.xlu0 %v718, 64
    %v721 = vpop.permute.xlu0 %720
    %v723 = vadd.f32 %v717, %v721
    %v724 = vtanh.pop %v723
    %v725 = vmul.f32 %v716, %v724
    %727 = vrot.lane.b32.xlu0 %v725, 64
    %v728 = vpop.permute.xlu0 %727
    %v729 = vsel %vm181, %v728, 0
    %731 = vmatprep.subr.mxu0 %v166
    %732 = vmatpush1.msra.mxu0 %v165
    %733 = vmatprep.subr.mxu0 %v168
    %734 = vmatpush1.msra.mxu0 %v167
    %735 = vmatprep.subr.mxu0 %v170
    %736 = vmatpush1.msra.mxu0 %v169
    %737 = vmatprep.subr.mxu0 %v172
    %738 = vmatpush1.msra.mxu0 %v171
    %739 = vmatprep.subr.mxu0 %v174
    %740 = vmatpush1.msra.mxu0 %v173
    %741 = vmatprep.subr.mxu0 %v176
    %742 = vmatpush1.msra.mxu0 %v175
    %743 = vmatprep.subr.mxu0 %v178
    %744 = vmatpush1.msra.mxu0 %v177
    %745 = vmatprep.subr.mxu0 %v180
    %746 = vmatpush1.msra.mxu0 %v179
    %747 = vmatprep.subr.mxu0 0.0
    %748 = vmatpush1.msra.mxu0 0.0
    %749 = vmatprep.subr.mxu0 0.0
    %750 = vmatpush1.msra.mxu0 0.0
    %751 = vmatprep.subr.mxu0 0.0
    %752 = vmatpush1.msra.mxu0 0.0
    %753 = vmatprep.subr.mxu0 0.0
    %754 = vmatpush1.msra.mxu0 0.0
    %755 = vmatprep.subr.mxu0 0.0
    %756 = vmatpush1.msra.mxu0 0.0
    %757 = vmatprep.subr.mxu0 0.0
    %758 = vmatpush1.msra.mxu0 0.0
    %759 = vmatprep.subr.mxu0 0.0
    %760 = vmatpush1.msra.mxu0 0.0
    %761 = vmatprep.subr.mxu0 0.0
    %762 = vmatpush1.msra.mxu0 0.0
    %763 = vmatprep.subr.mxu0 0.0
    %764 = vmatpush1.msra.mxu0 0.0
    %765 = vmatprep.subr.mxu0 0.0
    %766 = vmatpush1.msra.mxu0 0.0
    %767 = vmatprep.subr.mxu0 0.0
    %768 = vmatpush1.msra.mxu0 0.0
    %769 = vmatprep.subr.mxu0 0.0
    %770 = vmatpush1.msra.mxu0 0.0
    %771 = vmatprep.subr.mxu0 0.0
    %772 = vmatpush1.msra.mxu0 0.0
    %773 = vmatprep.subr.mxu0 0.0
    %774 = vmatpush1.msra.mxu0 0.0
    %775 = vmatprep.subr.mxu0 0.0
    %776 = vmatpush1.msra.mxu0 0.0
    %777 = vmatprep.subr.mxu0 0.0
    %778 = vmatpush1.msra.mxu0 0.0
    %779 = vmatprep.subr.mxu0 0.0
    %780 = vmatpush1.msra.mxu0 0.0
    %781 = vmatprep.subr.mxu0 0.0
    %782 = vmatpush1.msra.mxu0 0.0
    %783 = vmatprep.subr.mxu0 0.0
    %784 = vmatpush1.msra.mxu0 0.0
    %785 = vmatprep.subr.mxu0 0.0
    %786 = vmatpush1.msra.mxu0 0.0
    %787 = vmatprep.subr.mxu0 0.0
    %788 = vmatpush1.msra.mxu0 0.0
    %789 = vmatprep.subr.mxu0 0.0
    %790 = vmatpush1.msra.mxu0 0.0
    %791 = vmatprep.subr.mxu0 0.0
    %792 = vmatpush1.msra.mxu0 0.0
    %793 = vmatprep.subr.mxu0 0.0
    %794 = vmatpush1.msra.mxu0 0.0
    %795 = vmatprep.mubr.f32.mxu0 0.0
    %796 = vmatmul.mubr.f32.gmra.mrb[0].mxu0 %v729
    %v797 = vpop.f32.mrb[0].mxu0
    %v798 = vadd.f32 %v155, %v797
    %v799 = vpop.f32.mrb[0].mxu0
    %v800 = vadd.f32 %v157, %v799
    %801 = vdwg.mxu0
    %v802 = vtanh.pop %v798
    %v803 = vtanh.pop %v800
    %v804 = vmul.f32 %v802, 0.5
    %v805 = vadd.f32 %v804, 0.5
    %v806 = vmul.f32 %v803, 0.5
    %v807 = vadd.f32 %v806, 0.5
    %v808 = vmul.f32 %v805, %v723
    %v809 = vmul.f32 %v805, %v803
    %811 = vrot.lane.b32.xlu0 %v809, 64
    %v812 = vpop.permute.xlu0 %811
    %v814 = vadd.f32 %v808, %v812
    %v815 = vtanh.pop %v814
    %v816 = vmul.f32 %v807, %v815
    %818 = vrot.lane.b32.xlu0 %v816, 64
    %v819 = vpop.permute.xlu0 %818
    %v820 = vsel %vm181, %v819, 0
    %822 = vmatprep.subr.mxu0 %v166
    %823 = vmatpush1.msra.mxu0 %v165
    %824 = vmatprep.subr.mxu0 %v168
    %825 = vmatpush1.msra.mxu0 %v167
    %826 = vmatprep.subr.mxu0 %v170
    %827 = vmatpush1.msra.mxu0 %v169
    %828 = vmatprep.subr.mxu0 %v172
    %829 = vmatpush1.msra.mxu0 %v171
    %830 = vmatprep.subr.mxu0 %v174
    %831 = vmatpush1.msra.mxu0 %v173
    %832 = vmatprep.subr.mxu0 %v176
    %833 = vmatpush1.msra.mxu0 %v175
    %834 = vmatprep.subr.mxu0 %v178
    %835 = vmatpush1.msra.mxu0 %v177
    %836 = vmatprep.subr.mxu0 %v180
    %837 = vmatpush1.msra.mxu0 %v179
    %838 = vmatprep.subr.mxu0 0.0
    %839 = vmatpush1.msra.mxu0 0.0
    %840 = vmatprep.subr.mxu0 0.0
    %841 = vmatpush1.msra.mxu0 0.0
    %842 = vmatprep.subr.mxu0 0.0
    %843 = vmatpush1.msra.mxu0 0.0
    %844 = vmatprep.subr.mxu0 0.0
    %845 = vmatpush1.msra.mxu0 0.0
    %846 = vmatprep.subr.mxu0 0.0
    %847 = vmatpush1.msra.mxu0 0.0
    %848 = vmatprep.subr.mxu0 0.0
    %849 = vmatpush1.msra.mxu0 0.0
    %850 = vmatprep.subr.mxu0 0.0
    %851 = vmatpush1.msra.mxu0 0.0
    %852 = vmatprep.subr.mxu0 0.0
    %853 = vmatpush1.msra.mxu0 0.0
    %854 = vmatprep.subr.mxu0 0.0
    %855 = vmatpush1.msra.mxu0 0.0
    %856 = vmatprep.subr.mxu0 0.0
    %857 = vmatpush1.msra.mxu0 0.0
    %858 = vmatprep.subr.mxu0 0.0
    %859 = vmatpush1.msra.mxu0 0.0
    %860 = vmatprep.subr.mxu0 0.0
    %861 = vmatpush1.msra.mxu0 0.0
    %862 = vmatprep.subr.mxu0 0.0
    %863 = vmatpush1.msra.mxu0 0.0
    %864 = vmatprep.subr.mxu0 0.0
    %865 = vmatpush1.msra.mxu0 0.0
    %866 = vmatprep.subr.mxu0 0.0
    %867 = vmatpush1.msra.mxu0 0.0
    %868 = vmatprep.subr.mxu0 0.0
    %869 = vmatpush1.msra.mxu0 0.0
    %870 = vmatprep.subr.mxu0 0.0
    %871 = vmatpush1.msra.mxu0 0.0
    %872 = vmatprep.subr.mxu0 0.0
    %873 = vmatpush1.msra.mxu0 0.0
    %874 = vmatprep.subr.mxu0 0.0
    %875 = vmatpush1.msra.mxu0 0.0
    %876 = vmatprep.subr.mxu0 0.0
    %877 = vmatpush1.msra.mxu0 0.0
    %878 = vmatprep.subr.mxu0 0.0
    %879 = vmatpush1.msra.mxu0 0.0
    %880 = vmatprep.subr.mxu0 0.0
    %881 = vmatpush1.msra.mxu0 0.0
    %882 = vmatprep.subr.mxu0 0.0
    %883 = vmatpush1.msra.mxu0 0.0
    %884 = vmatprep.subr.mxu0 0.0
    %885 = vmatpush1.msra.mxu0 0.0
    %886 = vmatprep.mubr.f32.mxu0 0.0
    %887 = vmatmul.mubr.f32.gmra.mrb[0].mxu0 %v820
    %v888 = vpop.f32.mrb[0].mxu0
    %v889 = vadd.f32 %v161, %v888
    %v890 = vpop.f32.mrb[0].mxu0
    %v891 = vadd.f32 %v163, %v890
    %892 = vdwg.mxu0
    %v893 = vtanh.pop %v889
    %v894 = vtanh.pop %v891
    %v895 = vmul.f32 %v893, 0.5
    %v896 = vadd.f32 %v895, 0.5
    %v897 = vmul.f32 %v894, 0.5
    %v898 = vadd.f32 %v897, 0.5
    %v899 = vmul.f32 %v896, %v814
    %v900 = vmul.f32 %v896, %v894
    %902 = vrot.lane.b32.xlu0 %v900, 64
    %v903 = vpop.permute.xlu0 %902
    %v905 = vadd.f32 %v899, %v903
    %v906 = vtanh.pop %v905
    %v907 = vmul.f32 %v898, %v906
    %v908 = vld [vmem:[%s2] sm:$0xff]
    %v909 = vld [vmem:[%s2 + $0x8] sm:$0xff]
    %v910 = vld [vmem:[%s2 + $0x10] sm:$0xff]
    %v911 = vld [vmem:[%s2 + $0x18] sm:$0xff]
    %v912 = vld [vmem:[%s2 + $0x20] sm:$0xff]
    %v913 = vld [vmem:[%s2 + $0x28] sm:$0xff]
    %v914 = vld [vmem:[%s2 + $0x30] sm:$0xff]
    %v915 = vld [vmem:[%s2 + $0x38] sm:$0xff]
    %v916 = vld [vmem:[%s2 + $0x40] sm:$0xff]
    %v917 = vld [vmem:[%s2 + $0x48] sm:$0xff]
    %v918 = vld [vmem:[%s2 + $0x50] sm:$0xff]
    %v919 = vld [vmem:[%s2 + $0x58] sm:$0xff]
    %v920 = vld [vmem:[%s2 + $0x60] sm:$0xff]
    %v921 = vld [vmem:[%s2 + $0x68] sm:$0xff]
    %v922 = vld [vmem:[%s2 + $0x70] sm:$0xff]
    %924 = vrot.lane.b32.xlu0 %v907, 64
    %v925 = vpop.permute.xlu0 %924
    %v926 = vsel %vm181, %v925, 0
    %928 = vmatprep.subr.mxu0 0.0
    %929 = vmatpush1.msra.mxu0 %v908
    %930 = vmatprep.subr.mxu0 0.0
    %931 = vmatpush1.msra.mxu0 %v909
    %932 = vmatprep.subr.mxu0 0.0
    %933 = vmatpush1.msra.mxu0 %v910
    %934 = vmatprep.subr.mxu0 0.0
    %935 = vmatpush1.msra.mxu0 %v911
    %936 = vmatprep.subr.mxu0 0.0
    %937 = vmatpush1.msra.mxu0 %v912
    %938 = vmatprep.subr.mxu0 0.0
    %939 = vmatpush1.msra.mxu0 %v913
    %940 = vmatprep.subr.mxu0 0.0
    %941 = vmatpush1.msra.mxu0 %v914
    %942 = vmatprep.subr.mxu0 0.0
    %943 = vmatpush1.msra.mxu0 %v915
    %944 = vmatprep.subr.mxu0 0.0
    %945 = vmatpush1.msra.mxu0 0.0
    %946 = vmatprep.subr.mxu0 0.0
    %947 = vmatpush1.msra.mxu0 0.0
    %948 = vmatprep.subr.mxu0 0.0
    %949 = vmatpush1.msra.mxu0 0.0
    %950 = vmatprep.subr.mxu0 0.0
    %951 = vmatpush1.msra.mxu0 0.0
    %952 = vmatprep.subr.mxu0 0.0
    %953 = vmatpush1.msra.mxu0 0.0
    %954 = vmatprep.subr.mxu0 0.0
    %955 = vmatpush1.msra.mxu0 0.0
    %956 = vmatprep.subr.mxu0 0.0
    %957 = vmatpush1.msra.mxu0 0.0
    %958 = vmatprep.subr.mxu0 0.0
    %959 = vmatpush1.msra.mxu0 0.0
    %960 = vmatprep.subr.mxu0 0.0
    %961 = vmatpush1.msra.mxu0 0.0
    %962 = vmatprep.subr.mxu0 0.0
    %963 = vmatpush1.msra.mxu0 0.0
    %964 = vmatprep.subr.mxu0 0.0
    %965 = vmatpush1.msra.mxu0 0.0
    %966 = vmatprep.subr.mxu0 0.0
    %967 = vmatpush1.msra.mxu0 0.0
    %968 = vmatprep.subr.mxu0 0.0
    %969 = vmatpush1.msra.mxu0 0.0
    %970 = vmatprep.subr.mxu0 0.0
    %971 = vmatpush1.msra.mxu0 0.0
    %972 = vmatprep.subr.mxu0 0.0
    %973 = vmatpush1.msra.mxu0 0.0
    %974 = vmatprep.subr.mxu0 0.0
    %975 = vmatpush1.msra.mxu0 0.0
    %976 = vmatprep.subr.mxu0 0.0
    %977 = vmatpush1.msra.mxu0 0.0
    %978 = vmatprep.subr.mxu0 0.0
    %979 = vmatpush1.msra.mxu0 0.0
    %980 = vmatprep.subr.mxu0 0.0
    %981 = vmatpush1.msra.mxu0 0.0
    %982 = vmatprep.subr.mxu0 0.0
    %983 = vmatpush1.msra.mxu0 0.0
    %984 = vmatprep.subr.mxu0 0.0
    %985 = vmatpush1.msra.mxu0 0.0
    %986 = vmatprep.subr.mxu0 0.0
    %987 = vmatpush1.msra.mxu0 0.0
    %988 = vmatprep.subr.mxu0 0.0
    %989 = vmatpush1.msra.mxu0 0.0
    %990 = vmatprep.subr.mxu0 0.0
    %991 = vmatpush1.msra.mxu0 0.0
    %992 = vmatprep.mubr.f32.mxu0 0.0
    %993 = vmatmul.mubr.f32.gmra.mrb[0].mxu0 %v926
    %v994 = vpop.f32.mrb[0].mxu0
    %v995 = vadd.f32 %v916, %v994
    %v996 = vpop.f32.mrb[0].mxu0
    %997 = vdwg.mxu0
    %v998 = vmax.f32 %v995, 0.0
    %vm999 = vcmp.ne.f32.partialorder %v995, %v995
    %v1000 = vadd.f32 %v995, 0.0
    %v1001 = vand.u32 2147483647, %v995
    %v1002 = vsub.f32 0.0, %v1001
    %v1003 = vmul.f32 %v1002, 1.442695
    %v1004 = vpow.pop %v1003
    %v1005 = vadd.f32 %v1004, 1.0
    %v1006 = vlog2.pop %v1005
    %v1007 = vmul.f32 %v1006, 0.6931472
    %v1008 = vmul.f32 -0.5, %v1004
    %v1009 = vadd.f32 %v1008, 1.0
    %v1010 = vmul.f32 %v1009, %v1004
    %v1011 = vand.u32 2147483647, %v1004
    %vm1012 = vcmp.lt.f32.partialorder %v1011, 0.0004427343
    %v1013 = vsel %vm1012, %v1010, %v1007
    %v1014 = vadd.f32 %v998, %v1013
    %v1015 = vsel %vm999, %v1000, %v1014
    %vm1016 = vcmask 261120
    %v1018 = vsel %vm1016, %v1015, 0
    %1020 = vmatprep.subr.mxu0 0.0
    %1021 = vmatpush1.msra.mxu0 %v917
    %1022 = vmatprep.subr.mxu0 0.0
    %1023 = vmatpush1.msra.mxu0 %v918
    %1024 = vmatprep.subr.mxu0 0.0
    %1025 = vmatpush1.msra.mxu0 %v919
    %1026 = vmatprep.subr.mxu0 0.0
    %1027 = vmatpush1.msra.mxu0 %v920
    %1028 = vmatprep.subr.mxu0 0.0
    %1029 = vmatpush1.msra.mxu0 0.0
    %1030 = vmatprep.subr.mxu0 0.0
    %1031 = vmatpush1.msra.mxu0 0.0
    %1032 = vmatprep.subr.mxu0 0.0
    %1033 = vmatpush1.msra.mxu0 0.0
    %1034 = vmatprep.subr.mxu0 0.0
    %1035 = vmatpush1.msra.mxu0 0.0
    %1036 = vmatprep.subr.mxu0 0.0
    %1037 = vmatpush1.msra.mxu0 0.0
    %1038 = vmatprep.subr.mxu0 0.0
    %1039 = vmatpush1.msra.mxu0 0.0
    %1040 = vmatprep.subr.mxu0 0.0
    %1041 = vmatpush1.msra.mxu0 0.0
    %1042 = vmatprep.subr.mxu0 0.0
    %1043 = vmatpush1.msra.mxu0 0.0
    %1044 = vmatprep.subr.mxu0 0.0
    %1045 = vmatpush1.msra.mxu0 0.0
    %1046 = vmatprep.subr.mxu0 0.0
    %1047 = vmatpush1.msra.mxu0 0.0
    %1048 = vmatprep.subr.mxu0 0.0
    %1049 = vmatpush1.msra.mxu0 0.0
    %1050 = vmatprep.subr.mxu0 0.0
    %1051 = vmatpush1.msra.mxu0 0.0
    %1052 = vmatprep.subr.mxu0 0.0
    %1053 = vmatpush1.msra.mxu0 0.0
    %1054 = vmatprep.subr.mxu0 0.0
    %1055 = vmatpush1.msra.mxu0 0.0
    %1056 = vmatprep.subr.mxu0 0.0
    %1057 = vmatpush1.msra.mxu0 0.0
    %1058 = vmatprep.subr.mxu0 0.0
    %1059 = vmatpush1.msra.mxu0 0.0
    %1060 = vmatprep.subr.mxu0 0.0
    %1061 = vmatpush1.msra.mxu0 0.0
    %1062 = vmatprep.subr.mxu0 0.0
    %1063 = vmatpush1.msra.mxu0 0.0
    %1064 = vmatprep.subr.mxu0 0.0
    %1065 = vmatpush1.msra.mxu0 0.0
    %1066 = vmatprep.subr.mxu0 0.0
    %1067 = vmatpush1.msra.mxu0 0.0
    %1068 = vmatprep.subr.mxu0 0.0
    %1069 = vmatpush1.msra.mxu0 0.0
    %1070 = vmatprep.subr.mxu0 0.0
    %1071 = vmatpush1.msra.mxu0 0.0
    %1072 = vmatprep.subr.mxu0 0.0
    %1073 = vmatpush1.msra.mxu0 0.0
    %1074 = vmatprep.subr.mxu0 0.0
    %1075 = vmatpush1.msra.mxu0 0.0
    %1076 = vmatprep.subr.mxu0 0.0
    %1077 = vmatpush1.msra.mxu0 0.0
    %1078 = vmatprep.subr.mxu0 0.0
    %1079 = vmatpush1.msra.mxu0 0.0
    %1080 = vmatprep.subr.mxu0 0.0
    %1081 = vmatpush1.msra.mxu0 0.0
    %1082 = vmatprep.subr.mxu0 0.0
    %1083 = vmatpush1.msra.mxu0 0.0
    %1084 = vmatprep.mubr.f32.mxu0 0.0
    %1085 = vmatmul.mubr.f32.gmra.mrb[0].mxu0 %v1018
    %v1086 = vpop.f32.mrb[0].mxu0
    %v1087 = vadd.f32 %v921, %v1086
    %v1088 = vpop.f32.mrb[0].mxu0
    %1089 = vdwg.mxu0
    %v1090 = vmul.f32 %v1087, 1.442695
    %v1091 = vpow.pop %v1090
    %1093 = vrot.lane.b32.xlu0 %v922, 8
    %v1094 = vpop.permute.xlu0 %1093
    %v1096 = vmul.f32 %v1091, %v1094
    %1098 = vrot.lane.b32.xlu0 %v1096, 120
    %v1099 = vpop.permute.xlu0 %1098
    %v1101 = vadd.f32 %v1087, %v1099
    %vm1102 = vcmask 64512
    %1103 = vst.msk [vmem:[#allocation2] sm:$0xff] %vm1102, %v1101
    // Predicated region
    $region14: #{tpu_custom_call.1} parent=1 // pred_check
      _
    $region15: #{tpu_custom_call.1} parent=1 // pred_check_branch
      %1105 = sbr.rel (0) target = $region17
    $region16: #{tpu_custom_call.1} parent=1 // pred_region
      %s1107 = ssub.s32 128, 128
      %1108 = vsyncadd [#allocation3], %s1107
      %s1110 = sshll.u32 [#allocation2], 4
      %s1111 = int_to_ptr.vmem [resolvable:$true] %s1110
      %1113 = dma.vmem_to_hbm [thread:$0]  %s1111, 128, %s3, [#allocation3]
    $region17: #{tpu_custom_call.1} parent=1 // pred_fallthru
      _
    // Predicated region
    $region18: #{tpu_custom_call.1} parent=1 // pred_check
      _
    $region19: #{tpu_custom_call.1} parent=1 // pred_check_branch
      %1115 = sbr.rel (0) target = $region21
    $region20: #{tpu_custom_call.1} parent=1 // pred_region
      %1116 = dma.done [#allocation3], 128
    $region21: #{tpu_custom_call.1} parent=1 // pred_fallthru
      _
    %1117 = vsyncpa [#allocation3], 1

</llo_original>
